<compile_context>
chip_gen: v5e
topology: v5e:2x2
jax: 0.10.0
libtpu: 0.0.40
codegen_flags: <defaults>
</compile_context>

<pallas_src>
import math

import jax
import jax.numpy as jnp
from jax.experimental import pallas as pl
from jax.experimental.pallas import tpu as pltpu


_LANE = 128
_SUBLANE = {4: 8, 2: 16, 1: 32}            # sublane quantum per itemsize
_TARGET_BLOCK_BYTES = 2 * 1024 * 1024      # ~2 MiB per side: >=85% of the HBM
                                           # roofline at >=512-wide tiles while
                                           # keeping several grid steps.


def _prod(xs):
    return int(math.prod(xs)) if xs else 1


def _round_up(v, m):
    return ((v + m - 1) // m) * m


# ---------------------------------------------------------------------------
# VMEM-aware, capped tile selection.
# ---------------------------------------------------------------------------

def _vmem_limit_bytes():
    """At most half of physical VMEM (64 MiB on v5e/v6e, 32 MiB on v7x);
    also lifts the 16 MiB scoped default on v5e."""
    try:
        info = pltpu.get_tpu_info()
        cap = int(getattr(info, "vmem_capacity_bytes", 64 * 1024 * 1024))
    except Exception:
        cap = 64 * 1024 * 1024
    return min(cap // 2, 64 * 1024 * 1024)


def _block_vmem_bytes(ta, tb, itemsize):
    """VMEM footprint of one (ta, tb) input block + one (tb, ta) output block,
    including (sublane, 128-lane) padding (dtype-aware)."""
    sub = _SUBLANE.get(itemsize, 8)
    in_b = _round_up(ta, sub) * _round_up(tb, _LANE) * itemsize
    out_b = _round_up(tb, sub) * _round_up(ta, _LANE) * itemsize
    return in_b + out_b


def _pick_tile(dim, target, quantum):
    """Tile size <= target (multiple of `quantum`), preferring a divisor of
    `dim` in [target/2, target] so edge blocks are not ragged."""
    for cand in range(target, max(target // 2, quantum) - 1, -quantum):
        if dim % cand == 0:
            return cand
    return target


def _choose_tiles(a, b, itemsize, vmem_limit):
    """Capped, balanced tiles (~512 x 1024) rather than full-array blocks:
    keeps the grid at several steps (pipelining + megacore sharding), keeps
    both read and write DMA runs long, and leaves large VMEM headroom."""
    sub = _SUBLANE.get(itemsize, 8)
    ta = a if a <= 512 else _pick_tile(a, 512, sub)
    tb = b if b <= 1024 else _pick_tile(b, 1024, _LANE)

    # Safety net: shrink the wider side if the (in + out) block pair is still
    # oversized or would overflow the double-buffered VMEM budget (6 MiB of
    # headroom reserved for Mosaic's internal transpose staging).
    budget = max(vmem_limit - 6 * 1024 * 1024, 8 * 1024 * 1024)

    def too_big():
        blk = _block_vmem_bytes(ta, tb, itemsize)
        return blk > 5 * 1024 * 1024 or 2 * blk > budget

    while too_big() and (ta > sub or tb > _LANE):
        if tb >= ta and tb > _LANE:
            tb = max(_LANE, ((tb // 2) // _LANE) * _LANE)
        elif ta > sub:
            ta = max(sub, ((ta // 2) // sub) * sub)
        else:
            break
    return ta, tb


# ---------------------------------------------------------------------------
# General path: tiled, batched 2-D transpose  (N, A, B) -> (N, B, A).
# ---------------------------------------------------------------------------

def _transpose_tile_kernel(x_ref, o_ref):
    # (ta, tb) -> (tb, ta): one 2-D XLU transpose per tile, hidden under the
    # block DMAs (the kernel is HBM-bandwidth bound).
    # TODO(synk): on v7x (3.2 TB/s HBM) check the vector-extended slot in the
    # bundle dump; if the XLU binds, switch to an MXU identity-matmul transpose.
    o_ref[...] = jnp.transpose(x_ref[...], (1, 0))


def _batched_tiled_transpose(x3, vmem_limit):
    """x3: (N, A, B) -> (N, B, A), tiled over grid (N, A-tiles, B-tiles)."""
    n, a, b = x3.shape
    itemsize = jnp.dtype(x3.dtype).itemsize
    ta, tb = _choose_tiles(a, b, itemsize, vmem_limit)
    grid = (n, pl.cdiv(a, ta), pl.cdiv(b, tb))
    # TODO(synk): for sub-MiB blocks, sweep pipeline_mode=pl.Buffered(3) on the
    # input spec to hide strided-read DMA latency.
    return pl.pallas_call(
        _transpose_tile_kernel,
        out_shape=jax.ShapeDtypeStruct((n, b, a), x3.dtype),
        grid_spec=pltpu.PrefetchScalarGridSpec(
            num_scalar_prefetch=0,
            grid=grid,
            in_specs=[
                pl.BlockSpec((None, ta, tb), lambda i, ai, bi: (i, ai, bi)),
            ],
            out_specs=pl.BlockSpec((None, tb, ta), lambda i, ai, bi: (i, bi, ai)),
        ),
        compiler_params=pltpu.CompilerParams(
            dimension_semantics=("parallel", "parallel", "parallel"),
            vmem_limit_bytes=int(vmem_limit),
        ),
        cost_estimate=pl.CostEstimate(
            flops=0,
            transcendentals=0,
            bytes_accessed=2 * x3.size * itemsize,
        ),
    )(x3)


# ---------------------------------------------------------------------------
# Small-A path: lane-dense output via one-hot MXU interleave.
# (NCHW -> NHWC with C <= 8 etc.)
# ---------------------------------------------------------------------------

def _interleave_matrices(a):
    """One-hot (A, 128, A*128) bf16 matrices P with P[i, c, c*A + i] = 1, so
    (rows, 128) @ P[i] scatters channel i's lanes to output lanes i, i+A, ..."""
    i = jnp.arange(a, dtype=jnp.int32)[:, None, None]
    c = jnp.arange(_LANE, dtype=jnp.int32)[None, :, None]
    l2 = jnp.arange(a * _LANE, dtype=jnp.int32)[None, None, :]
    return (l2 == c * a + i).astype(jnp.bfloat16)


def _interleave_matmul_kernel(x_ref, p_ref, o_ref):
    # x_ref: (A, tR, 128)    lane-dense input rows, one slab per channel
    # p_ref: (A, 128, A*128) one-hot interleave matrices (exact 0/1 in bf16)
    # o_ref: (tR, A*128)     lane-dense interleaved output rows
    # The interleave out[r, c*A + i] = x[i, r, c] is a lane gather; it runs on
    # the otherwise idle MXU so both load and store DMAs stay fully lane-dense
    # (no vst.msk / tiny strided HBM store runs on the output side).
    a = x_ref.shape[0]
    acc = jnp.zeros(o_ref.shape, jnp.float32)
    for i in range(a):
        xi = x_ref[i]                                  # (tR, 128)
        if xi.dtype == jnp.float32:
            # Exact f32 transport through the bf16 MXU: split into three bf16
            # pieces (8+8+8 mantissa bits).  Each piece is bf16-exact, the 0/1
            # weights are exact, and the f32 accumulation reconstructs x.
            hi = xi.astype(jnp.bfloat16)
            r1 = xi - hi.astype(jnp.float32)
            mid = r1.astype(jnp.bfloat16)
            lo = (r1 - mid.astype(jnp.float32)).astype(jnp.bfloat16)
            pieces = (hi, mid, lo)
        else:                                          # bf16: already exact
            pieces = (xi,)
        for piece in pieces:
            acc = acc + jnp.dot(piece, p_ref[i],
                                preferred_element_type=jnp.float32)
    o_ref[...] = acc.astype(o_ref.dtype)


def _small_last_dim_transpose(x3, vmem_limit):
    """(N, A, B) -> (N, B, A) for small A with lane-dense loads AND stores: the
    output is presented to Pallas as (N, B//128, A*128) so every store DMA is
    a long contiguous run, and the (128 -> A*128) lane interleave is done on
    the MXU (review: lane-dense out_spec is the biggest single lever here)."""
    n, a, b = x3.shape
    itemsize = jnp.dtype(x3.dtype).itemsize
    rows = b // _LANE
    x4 = jnp.reshape(x3, (n, a, rows, _LANE))          # metadata-only view
    # ~1 MiB blocks per side (the f32 accumulator doubles the live footprint).
    tr = max(8, (1024 * 1024 // (a * _LANE * itemsize)) // 8 * 8)
    tr = min(rows, tr)
    p = _interleave_matrices(a)
    grid = (n, pl.cdiv(rows, tr))
    passes = 3 if x3.dtype == jnp.float32 else 1
    out = pl.pallas_call(
        _interleave_matmul_kernel,
        out_shape=jax.ShapeDtypeStruct((n, rows, a * _LANE), x3.dtype),
        grid_spec=pltpu.PrefetchScalarGridSpec(
            num_scalar_prefetch=0,
            grid=grid,
            in_specs=[
                pl.BlockSpec((None, a, tr, _LANE), lambda ni, bi: (ni, 0, bi, 0)),
                # One-hot matrices: constant index map -> fetched once, resident.
                pl.BlockSpec((a, _LANE, a * _LANE), lambda ni, bi: (0, 0, 0)),
            ],
            out_specs=pl.BlockSpec((None, tr, a * _LANE),
                                   lambda ni, bi: (ni, bi, 0)),
        ),
        compiler_params=pltpu.CompilerParams(
            dimension_semantics=("parallel", "parallel"),
            vmem_limit_bytes=int(vmem_limit),
        ),
        cost_estimate=pl.CostEstimate(
            flops=2 * passes * a * _LANE * int(x3.size),
            transcendentals=0,
            bytes_accessed=2 * x3.size * itemsize + p.size * 2,
        ),
    )(x4, p)
    return jnp.reshape(out, (n, b, a))


# ---------------------------------------------------------------------------
# Dispatch + permutation decomposition.
# ---------------------------------------------------------------------------

def _two_group_transpose(x3):
    """(N, A, B) -> (N, B, A) using the best available tiled kernel."""
    _, a, b = x3.shape
    vmem_limit = _vmem_limit_bytes()
    small_a_ok = (
        2 <= a <= 8
        and b % _LANE == 0
        and (x3.dtype == jnp.float32 or x3.dtype == jnp.bfloat16)
    )
    # NOTE: the one-hot MXU path smears non-finite values (0 * NaN = NaN)
    # across the 128 lanes they share an input row with; exact for finite data.
    if small_a_ok:
        return _small_last_dim_transpose(x3, vmem_limit)
    return _batched_tiled_transpose(x3, vmem_limit)


def _apply_group_rotation(x, p, s):
    """Swap the contiguous dim groups [p, s) and [s, ndim) behind the identity
    prefix [0, p): a single tiled (N, A, B) -> (N, B, A) transpose."""
    shape = x.shape
    new_shape = shape[:p] + shape[s:] + shape[p:s]
    n = _prod(shape[:p])
    a = _prod(shape[p:s])
    b = _prod(shape[s:])
    if a == 1 or b == 1:
        return jnp.reshape(x, new_shape)               # metadata-only, no kernel
    y3 = _two_group_transpose(jnp.reshape(x, (n, a, b)))
    return jnp.reshape(y3, new_shape)


def pallas_permute(x, perm):
    ndim = x.ndim
    perm = tuple(int(p) % ndim for p in perm) if ndim else ()
    assert sorted(perm) == list(range(ndim)), f"invalid permutation {perm}"
    if perm == tuple(range(ndim)):
        return x                                       # identity (torch returns a view)

    # Greedy decomposition into "suffix rotation" steps.  Each step is one
    # tiled, pipelined HBM->HBM transpose; common NCHW<->NHWC / two-group
    # permutes need exactly one step, anything else needs <= ndim-1 steps.
    # TODO(synk): fuse "prefix + swap two middle groups + common suffix" perms
    # (e.g. (0, 2, 1, 3)) into a single payload-transpose pass instead of two.
    cur = list(range(ndim))
    out = x
    for p in range(ndim):
        if cur[p] == perm[p]:
            continue
        s = cur.index(perm[p])
        out = _apply_group_rotation(out, p, s)
        cur = cur[:p] + cur[s:] + cur[p:s]
    assert cur == list(perm)
    return out


class Permute:
    """JAX/Pallas mirror of the PyTorch Permute module (no parameters)."""

    def __init__(self, *args):
        self.args = tuple(args)

    def __call__(self, x):
        return pallas_permute(x, self.args)


if __name__ == "__main__":
    key = jax.random.PRNGKey(0)
    # Small NCHW input: batch=2, channels=4, spatial=16x16.
    x = jax.random.normal(key, (2, 4, 16, 16), dtype=jnp.float32)

    # NCHW -> NHWC: exercises the lane-dense small-C (MXU interleave) path.
    out = jax.block_until_ready(Permute(0, 2, 3, 1)(x))
    ref = jnp.transpose(x, (0, 2, 3, 1))
    assert out.shape == ref.shape and out.dtype == ref.dtype
    assert bool(jnp.allclose(out, ref)), "NCHW->NHWC mismatch"

    # NHWC -> NCHW: exercises the general tiled-transpose path.
    out2 = jax.block_until_ready(Permute(0, 3, 1, 2)(ref))
    assert bool(jnp.allclose(out2, jnp.transpose(ref, (0, 3, 1, 2)))), \
        "NHWC->NCHW mismatch"

    # A non-two-group permutation: exercises the multi-step decomposition.
    y = jax.random.normal(jax.random.PRNGKey(0), (2, 4, 8, 32), dtype=jnp.float32)
    out3 = jax.block_until_ready(Permute(0, 2, 1, 3)(y))
    assert bool(jnp.allclose(out3, jnp.transpose(y, (0, 2, 1, 3)))), \
        "generic permute mismatch"

    print("KERNEL_OK")
</pallas_src>

<mosaic_0001>
module attributes {stable_mosaic.version = 11 : i64} {
  func.func @_interleave_matmul_kernel(%arg0: i32, %arg1: i32, %arg2: memref<1x4x2x128xf32, #tpu.memory_space<vmem>>, %arg3: memref<4x128x512xbf16, #tpu.memory_space<vmem>>, %arg4: memref<1x2x512xf32, #tpu.memory_space<vmem>>) attributes {dimension_semantics = [#tpu.dimension_semantics<parallel>, #tpu.dimension_semantics<parallel>], iteration_bounds = array<i64: 2, 1>, scalar_prefetch = 0 : i64, scratch_operands = 0 : i64, tpu.core_type = #tpu.core_type<tc>, window_params = [{transform_indices = @transform_0, window_bounds = array<i64: 1, 4, 2, 128>}, {pipeline_mode = #tpu.pipeline_mode<synchronous>, transform_indices = @transform_1, window_bounds = array<i64: 4, 128, 512>}, {transform_indices = @transform_2, window_bounds = array<i64: 1, 2, 512>}]} {
    %cst = arith.constant 0.000000e+00 : f32
    %0 = vector.broadcast %cst : f32 to vector<2x512xf32>
    %c0 = arith.constant 0 : index
    %c0_0 = arith.constant 0 : index
    %c0_1 = arith.constant 0 : index
    %c0_2 = arith.constant 0 : index
    %1 = vector.load %arg2[%c0, %c0_0, %c0_1, %c0_2] : memref<1x4x2x128xf32, #tpu.memory_space<vmem>>, vector<1x1x2x128xf32>
    %2 = vector.shape_cast %1 : vector<1x1x2x128xf32> to vector<2x128xf32>
    %3 = arith.truncf %2 : vector<2x128xf32> to vector<2x128xbf16>
    %4 = arith.extf %3 : vector<2x128xbf16> to vector<2x128xf32>
    %5 = arith.subf %2, %4 : vector<2x128xf32>
    %6 = arith.truncf %5 : vector<2x128xf32> to vector<2x128xbf16>
    %7 = arith.extf %6 : vector<2x128xbf16> to vector<2x128xf32>
    %8 = arith.subf %5, %7 : vector<2x128xf32>
    %9 = arith.truncf %8 : vector<2x128xf32> to vector<2x128xbf16>
    %c0_3 = arith.constant 0 : index
    %c0_4 = arith.constant 0 : index
    %c0_5 = arith.constant 0 : index
    %10 = vector.load %arg3[%c0_3, %c0_4, %c0_5] : memref<4x128x512xbf16, #tpu.memory_space<vmem>>, vector<1x128x512xbf16>
    %11 = vector.shape_cast %10 : vector<1x128x512xbf16> to vector<128x512xbf16>
    %cst_6 = arith.constant dense<0.000000e+00> : vector<2x512xf32>
    %12 = tpu.matmul %3, %11, %cst_6 {dimension_numbers = #tpu.dot_dimension_numbers<[1], [0], [0], [1], [0, 0, 1, 1], [], []>} : vector<2x128xbf16>, vector<128x512xbf16>, vector<2x512xf32> -> vector<2x512xf32>
    %13 = arith.addf %0, %12 : vector<2x512xf32>
    %c0_7 = arith.constant 0 : index
    %c0_8 = arith.constant 0 : index
    %c0_9 = arith.constant 0 : index
    %14 = vector.load %arg3[%c0_7, %c0_8, %c0_9] : memref<4x128x512xbf16, #tpu.memory_space<vmem>>, vector<1x128x512xbf16>
    %15 = vector.shape_cast %14 : vector<1x128x512xbf16> to vector<128x512xbf16>
    %cst_10 = arith.constant dense<0.000000e+00> : vector<2x512xf32>
    %16 = tpu.matmul %6, %15, %cst_10 {dimension_numbers = #tpu.dot_dimension_numbers<[1], [0], [0], [1], [0, 0, 1, 1], [], []>} : vector<2x128xbf16>, vector<128x512xbf16>, vector<2x512xf32> -> vector<2x512xf32>
    %17 = arith.addf %13, %16 : vector<2x512xf32>
    %c0_11 = arith.constant 0 : index
    %c0_12 = arith.constant 0 : index
    %c0_13 = arith.constant 0 : index
    %18 = vector.load %arg3[%c0_11, %c0_12, %c0_13] : memref<4x128x512xbf16, #tpu.memory_space<vmem>>, vector<1x128x512xbf16>
    %19 = vector.shape_cast %18 : vector<1x128x512xbf16> to vector<128x512xbf16>
    %cst_14 = arith.constant dense<0.000000e+00> : vector<2x512xf32>
    %20 = tpu.matmul %9, %19, %cst_14 {dimension_numbers = #tpu.dot_dimension_numbers<[1], [0], [0], [1], [0, 0, 1, 1], [], []>} : vector<2x128xbf16>, vector<128x512xbf16>, vector<2x512xf32> -> vector<2x512xf32>
    %21 = arith.addf %17, %20 : vector<2x512xf32>
    %c0_15 = arith.constant 0 : index
    %c1 = arith.constant 1 : index
    %c0_16 = arith.constant 0 : index
    %c0_17 = arith.constant 0 : index
    %22 = vector.load %arg2[%c0_15, %c1, %c0_16, %c0_17] : memref<1x4x2x128xf32, #tpu.memory_space<vmem>>, vector<1x1x2x128xf32>
    %23 = vector.shape_cast %22 : vector<1x1x2x128xf32> to vector<2x128xf32>
    %24 = arith.truncf %23 : vector<2x128xf32> to vector<2x128xbf16>
    %25 = arith.extf %24 : vector<2x128xbf16> to vector<2x128xf32>
    %26 = arith.subf %23, %25 : vector<2x128xf32>
    %27 = arith.truncf %26 : vector<2x128xf32> to vector<2x128xbf16>
    %28 = arith.extf %27 : vector<2x128xbf16> to vector<2x128xf32>
    %29 = arith.subf %26, %28 : vector<2x128xf32>
    %30 = arith.truncf %29 : vector<2x128xf32> to vector<2x128xbf16>
    %c1_18 = arith.constant 1 : index
    %c0_19 = arith.constant 0 : index
    %c0_20 = arith.constant 0 : index
    %31 = vector.load %arg3[%c1_18, %c0_19, %c0_20] : memref<4x128x512xbf16, #tpu.memory_space<vmem>>, vector<1x128x512xbf16>
    %32 = vector.shape_cast %31 : vector<1x128x512xbf16> to vector<128x512xbf16>
    %cst_21 = arith.constant dense<0.000000e+00> : vector<2x512xf32>
    %33 = tpu.matmul %24, %32, %cst_21 {dimension_numbers = #tpu.dot_dimension_numbers<[1], [0], [0], [1], [0, 0, 1, 1], [], []>} : vector<2x128xbf16>, vector<128x512xbf16>, vector<2x512xf32> -> vector<2x512xf32>
    %34 = arith.addf %21, %33 : vector<2x512xf32>
    %c1_22 = arith.constant 1 : index
    %c0_23 = arith.constant 0 : index
    %c0_24 = arith.constant 0 : index
    %35 = vector.load %arg3[%c1_22, %c0_23, %c0_24] : memref<4x128x512xbf16, #tpu.memory_space<vmem>>, vector<1x128x512xbf16>
    %36 = vector.shape_cast %35 : vector<1x128x512xbf16> to vector<128x512xbf16>
    %cst_25 = arith.constant dense<0.000000e+00> : vector<2x512xf32>
    %37 = tpu.matmul %27, %36, %cst_25 {dimension_numbers = #tpu.dot_dimension_numbers<[1], [0], [0], [1], [0, 0, 1, 1], [], []>} : vector<2x128xbf16>, vector<128x512xbf16>, vector<2x512xf32> -> vector<2x512xf32>
    %38 = arith.addf %34, %37 : vector<2x512xf32>
    %c1_26 = arith.constant 1 : index
    %c0_27 = arith.constant 0 : index
    %c0_28 = arith.constant 0 : index
    %39 = vector.load %arg3[%c1_26, %c0_27, %c0_28] : memref<4x128x512xbf16, #tpu.memory_space<vmem>>, vector<1x128x512xbf16>
    %40 = vector.shape_cast %39 : vector<1x128x512xbf16> to vector<128x512xbf16>
    %cst_29 = arith.constant dense<0.000000e+00> : vector<2x512xf32>
    %41 = tpu.matmul %30, %40, %cst_29 {dimension_numbers = #tpu.dot_dimension_numbers<[1], [0], [0], [1], [0, 0, 1, 1], [], []>} : vector<2x128xbf16>, vector<128x512xbf16>, vector<2x512xf32> -> vector<2x512xf32>
    %42 = arith.addf %38, %41 : vector<2x512xf32>
    %c0_30 = arith.constant 0 : index
    %c2 = arith.constant 2 : index
    %c0_31 = arith.constant 0 : index
    %c0_32 = arith.constant 0 : index
    %43 = vector.load %arg2[%c0_30, %c2, %c0_31, %c0_32] : memref<1x4x2x128xf32, #tpu.memory_space<vmem>>, vector<1x1x2x128xf32>
    %44 = vector.shape_cast %43 : vector<1x1x2x128xf32> to vector<2x128xf32>
    %45 = arith.truncf %44 : vector<2x128xf32> to vector<2x128xbf16>
    %46 = arith.extf %45 : vector<2x128xbf16> to vector<2x128xf32>
    %47 = arith.subf %44, %46 : vector<2x128xf32>
    %48 = arith.truncf %47 : vector<2x128xf32> to vector<2x128xbf16>
    %49 = arith.extf %48 : vector<2x128xbf16> to vector<2x128xf32>
    %50 = arith.subf %47, %49 : vector<2x128xf32>
    %51 = arith.truncf %50 : vector<2x128xf32> to vector<2x128xbf16>
    %c2_33 = arith.constant 2 : index
    %c0_34 = arith.constant 0 : index
    %c0_35 = arith.constant 0 : index
    %52 = vector.load %arg3[%c2_33, %c0_34, %c0_35] : memref<4x128x512xbf16, #tpu.memory_space<vmem>>, vector<1x128x512xbf16>
    %53 = vector.shape_cast %52 : vector<1x128x512xbf16> to vector<128x512xbf16>
    %cst_36 = arith.constant dense<0.000000e+00> : vector<2x512xf32>
    %54 = tpu.matmul %45, %53, %cst_36 {dimension_numbers = #tpu.dot_dimension_numbers<[1], [0], [0], [1], [0, 0, 1, 1], [], []>} : vector<2x128xbf16>, vector<128x512xbf16>, vector<2x512xf32> -> vector<2x512xf32>
    %55 = arith.addf %42, %54 : vector<2x512xf32>
    %c2_37 = arith.constant 2 : index
    %c0_38 = arith.constant 0 : index
    %c0_39 = arith.constant 0 : index
    %56 = vector.load %arg3[%c2_37, %c0_38, %c0_39] : memref<4x128x512xbf16, #tpu.memory_space<vmem>>, vector<1x128x512xbf16>
    %57 = vector.shape_cast %56 : vector<1x128x512xbf16> to vector<128x512xbf16>
    %cst_40 = arith.constant dense<0.000000e+00> : vector<2x512xf32>
    %58 = tpu.matmul %48, %57, %cst_40 {dimension_numbers = #tpu.dot_dimension_numbers<[1], [0], [0], [1], [0, 0, 1, 1], [], []>} : vector<2x128xbf16>, vector<128x512xbf16>, vector<2x512xf32> -> vector<2x512xf32>
    %59 = arith.addf %55, %58 : vector<2x512xf32>
    %c2_41 = arith.constant 2 : index
    %c0_42 = arith.constant 0 : index
    %c0_43 = arith.constant 0 : index
    %60 = vector.load %arg3[%c2_41, %c0_42, %c0_43] : memref<4x128x512xbf16, #tpu.memory_space<vmem>>, vector<1x128x512xbf16>
    %61 = vector.shape_cast %60 : vector<1x128x512xbf16> to vector<128x512xbf16>
    %cst_44 = arith.constant dense<0.000000e+00> : vector<2x512xf32>
    %62 = tpu.matmul %51, %61, %cst_44 {dimension_numbers = #tpu.dot_dimension_numbers<[1], [0], [0], [1], [0, 0, 1, 1], [], []>} : vector<2x128xbf16>, vector<128x512xbf16>, vector<2x512xf32> -> vector<2x512xf32>
    %63 = arith.addf %59, %62 : vector<2x512xf32>
    %c0_45 = arith.constant 0 : index
    %c3 = arith.constant 3 : index
    %c0_46 = arith.constant 0 : index
    %c0_47 = arith.constant 0 : index
    %64 = vector.load %arg2[%c0_45, %c3, %c0_46, %c0_47] : memref<1x4x2x128xf32, #tpu.memory_space<vmem>>, vector<1x1x2x128xf32>
    %65 = vector.shape_cast %64 : vector<1x1x2x128xf32> to vector<2x128xf32>
    %66 = arith.truncf %65 : vector<2x128xf32> to vector<2x128xbf16>
    %67 = arith.extf %66 : vector<2x128xbf16> to vector<2x128xf32>
    %68 = arith.subf %65, %67 : vector<2x128xf32>
    %69 = arith.truncf %68 : vector<2x128xf32> to vector<2x128xbf16>
    %70 = arith.extf %69 : vector<2x128xbf16> to vector<2x128xf32>
    %71 = arith.subf %68, %70 : vector<2x128xf32>
    %72 = arith.truncf %71 : vector<2x128xf32> to vector<2x128xbf16>
    %c3_48 = arith.constant 3 : index
    %c0_49 = arith.constant 0 : index
    %c0_50 = arith.constant 0 : index
    %73 = vector.load %arg3[%c3_48, %c0_49, %c0_50] : memref<4x128x512xbf16, #tpu.memory_space<vmem>>, vector<1x128x512xbf16>
    %74 = vector.shape_cast %73 : vector<1x128x512xbf16> to vector<128x512xbf16>
    %cst_51 = arith.constant dense<0.000000e+00> : vector<2x512xf32>
    %75 = tpu.matmul %66, %74, %cst_51 {dimension_numbers = #tpu.dot_dimension_numbers<[1], [0], [0], [1], [0, 0, 1, 1], [], []>} : vector<2x128xbf16>, vector<128x512xbf16>, vector<2x512xf32> -> vector<2x512xf32>
    %76 = arith.addf %63, %75 : vector<2x512xf32>
    %c3_52 = arith.constant 3 : index
    %c0_53 = arith.constant 0 : index
    %c0_54 = arith.constant 0 : index
    %77 = vector.load %arg3[%c3_52, %c0_53, %c0_54] : memref<4x128x512xbf16, #tpu.memory_space<vmem>>, vector<1x128x512xbf16>
    %78 = vector.shape_cast %77 : vector<1x128x512xbf16> to vector<128x512xbf16>
    %cst_55 = arith.constant dense<0.000000e+00> : vector<2x512xf32>
    %79 = tpu.matmul %69, %78, %cst_55 {dimension_numbers = #tpu.dot_dimension_numbers<[1], [0], [0], [1], [0, 0, 1, 1], [], []>} : vector<2x128xbf16>, vector<128x512xbf16>, vector<2x512xf32> -> vector<2x512xf32>
    %80 = arith.addf %76, %79 : vector<2x512xf32>
    %c3_56 = arith.constant 3 : index
    %c0_57 = arith.constant 0 : index
    %c0_58 = arith.constant 0 : index
    %81 = vector.load %arg3[%c3_56, %c0_57, %c0_58] : memref<4x128x512xbf16, #tpu.memory_space<vmem>>, vector<1x128x512xbf16>
    %82 = vector.shape_cast %81 : vector<1x128x512xbf16> to vector<128x512xbf16>
    %cst_59 = arith.constant dense<0.000000e+00> : vector<2x512xf32>
    %83 = tpu.matmul %72, %82, %cst_59 {dimension_numbers = #tpu.dot_dimension_numbers<[1], [0], [0], [1], [0, 0, 1, 1], [], []>} : vector<2x128xbf16>, vector<128x512xbf16>, vector<2x512xf32> -> vector<2x512xf32>
    %84 = arith.addf %80, %83 : vector<2x512xf32>
    %c0_60 = arith.constant 0 : index
    %c0_61 = arith.constant 0 : index
    %c0_62 = arith.constant 0 : index
    %85 = vector.load %arg4[%c0_60, %c0_61, %c0_62] : memref<1x2x512xf32, #tpu.memory_space<vmem>>, vector<1x2x512xf32>
    %86 = vector.shape_cast %85 : vector<1x2x512xf32> to vector<2x512xf32>
    %87 = vector.shape_cast %84 : vector<2x512xf32> to vector<1x2x512xf32>
    tpu.vector_store %arg4[%c0_60, %c0_61, %c0_62], %87 {strides = array<i32>} : memref<1x2x512xf32, #tpu.memory_space<vmem>>, vector<1x2x512xf32>,
    return
  }
  func.func @transform_0(%arg0: i32, %arg1: i32) -> (i32, i32, i32, i32) {
    %c0_i32 = arith.constant 0 : i32
    %c0_i32_0 = arith.constant 0 : i32
    %c0_i32_1 = arith.constant 0 : i32
    return %arg0, %c0_i32, %arg1, %c0_i32_0 : i32, i32, i32, i32
  }
  func.func @transform_1(%arg0: i32, %arg1: i32) -> (i32, i32, i32) {
    %c0_i32 = arith.constant 0 : i32
    %c0_i32_0 = arith.constant 0 : i32
    %c0_i32_1 = arith.constant 0 : i32
    %c0_i32_2 = arith.constant 0 : i32
    return %c0_i32, %c0_i32_0, %c0_i32_1 : i32, i32, i32
  }
  func.func @transform_2(%arg0: i32, %arg1: i32) -> (i32, i32, i32) {
    %c0_i32 = arith.constant 0 : i32
    %c0_i32_0 = arith.constant 0 : i32
    return %arg0, %arg1, %c0_i32 : i32, i32, i32
  }
}

</mosaic_0001>

<llo_original>
// kernel: tpu_custom_call.1
$region0: #{tpu_custom_call.1}
  #allocation0 [shape = 'u32[]', space=smem, size = 0x4, offset = 0x4, fixed_abs, tag = 'smem constant byte address 0x4 - core index']
  #allocation1 [shape = 'u32[72,128]{1,0:T(1,128)}', space=vmem, size = 0x9000, scoped, tag = 'internal scratch']
  %s0 = inlined_call_operand.hbm [shape: f32[2,4,2,128], index: 0, kind: input, shape index: {}]
  %s1 = inlined_call_operand.hbm [shape: bf16[4,128,512], index: 1, kind: input, shape index: {}]
  %s2 = inlined_call_operand.hbm [shape: f32[2,2,512], index: 2, kind: output, shape index: {}]
  %s3 = sld [smem:[#allocation0]]
  $region49: #{tpu_custom_call.1} parent=0
    _
  %s5 = ssub.s32 1, %s3
  %s6 = scalar_select 0, %s5, %s3
  $region1: #{tpu_custom_call.1} parent=0
    #allocation2 [shape = 'u8[8192]{0}', space=vmem, size = 0x2000, scoped, tag = 'input window, operand 0']
    #allocation3 [shape = 's32[2]{0}', space=sflag, size = 0x8, scoped, tag = 'scoped memory for tpu_custom_call.1']
    #allocation4 [shape = 's32[2]{0}', space=sflag, size = 0x8, scoped, tag = 'scoped memory for tpu_custom_call.1']
    #allocation5 [shape = 'u8[524288]{0}', space=vmem, size = 0x80000, scoped, tag = 'input window, operand 1, single buffered']
    #allocation6 [shape = 's32[1]{0}', space=sflag, size = 0x4, scoped, tag = 'scoped memory for tpu_custom_call.1']
    #allocation7 [shape = 'u8[8192]{0}', space=vmem, size = 0x2000, scoped, tag = 'output window, operand 0']
    %7 = vsyncpa [#allocation3], 0
    %s8 = scalar_lea.sflag [#allocation3], 1
    %9 = vsyncpa %s8, 0
    %10 = vsyncpa [#allocation6], 0
    %11 = vsyncpa [#allocation4], 0
    %s12 = scalar_lea.sflag [#allocation4], 1
    %13 = vsyncpa %s12, 0
    loop: start=0, step=1, limit=4
    $region2: #{tpu_custom_call.1} parent=1 // loop_pre_header
      _
    $region3: #{tpu_custom_call.1} parent=1 // loop_header
      %s15 = sphi 0, %s19
      %p16 = scmp.ge.s32.totalorder %s15, 4
      %s22 = sphi 0, %s34
      %s23 = sphi 0, %s30
      %s24 = sphi 0, %s22
      %s25 = sphi 0, %s23
      %s26 = sphi 0, %s24
      %s27 = sphi 0, %s25
      %s39 = sphi 0, %s41
      %s42 = sphi 0, %s39
      %s43 = sphi 0, %s42
      %s59 = sphi 0, %s43
      %s63 = sphi 0, %s63
      %s65 = sphi 0, %s63
      %s66 = sphi 0, %s65
      %s80 = sphi 0, %s66
      %s88 = sphi 0, %s90
      %s91 = sphi 0, %s88
      %s92 = sphi 0, %s91
      %s108 = sphi 0, %s92
    $region4: #{tpu_custom_call.1} parent=1 // loop_header_branch
      %18 = sbr.rel (%p16) target = $region8
    $region5: #{tpu_custom_call.1} parent=1 // loop_body
      %s20 = ssub.s32 %s15, 1
      %s21 = ssub.s32 %s15, 2
      %s28 = sadd.s32 1, %s23
      %p29 = scmp.ge.s32.totalorder %s28, 1
      %s30 = scalar_select %p29, 0, %s28
      %s31 = sadd.s32 1, %s22
      %s32 = scalar_select %p29, %s31, %s22
      %p33 = scmp.ge.s32.totalorder %s32, 2
      %s34 = scalar_select %p33, 0, %s32
      %s35 = ssub.s32 %s22, %s34
      %s36 = ssub.s32 %s23, %s30
      %s37 = sor.u32 %s35, %s36
      %p38 = scmp.eq.s32.totalorder %s37, 0
      %s40 = sadd.s32 %s39, 1
      %s41 = scalar_select %p38, %s39, %s40
      %p44 = pneg %p38
      %p45 = scmp.eq.s32.totalorder %s15, 1
      %p46 = por %p44, %p45
      %p47 = scmp.ne.s32.totalorder %s39, %s42
      %p48 = scmp.eq.s32.totalorder %s15, 0
      %p49 = por %p47, %p48
      %p50 = scmp.ne.s32.totalorder %s39, %s42
      %p51 = scmp.eq.s32.totalorder %s20, 1
      %p52 = por %p50, %p51
      %p53 = scmp.ne.s32.totalorder %s42, %s43
      %p54 = scmp.eq.s32.totalorder %s20, 0
      %p55 = por %p53, %p54
      %p56 = scmp.ne.s32.totalorder %s42, %s43
      %p57 = scmp.eq.s32.totalorder %s21, 1
      %p58 = por %p56, %p57
      %p60 = scmp.ne.s32.totalorder %s43, %s59
      %p61 = scmp.eq.s32.totalorder %s21, 0
      %p62 = por %p60, %p61
      %s64 = sadd.s32 %s63, 1
      %p67 = scmp.eq.s32.totalorder %s15, 1
      %p68 = scmp.ne.s32.totalorder %s63, %s65
      %p69 = scmp.eq.s32.totalorder %s15, 0
      %p70 = por %p68, %p69
      %p71 = scmp.ne.s32.totalorder %s63, %s65
      %p72 = scmp.eq.s32.totalorder %s20, 1
      %p73 = por %p71, %p72
      %p74 = scmp.ne.s32.totalorder %s65, %s66
      %p75 = scmp.eq.s32.totalorder %s20, 0
      %p76 = por %p74, %p75
      %p77 = scmp.ne.s32.totalorder %s65, %s66
      %p78 = scmp.eq.s32.totalorder %s21, 1
      %p79 = por %p77, %p78
      %p81 = scmp.ne.s32.totalorder %s66, %s80
      %p82 = scmp.eq.s32.totalorder %s21, 0
      %p83 = por %p81, %p82
      %s84 = ssub.s32 %s22, %s34
      %s85 = ssub.s32 %s23, %s30
      %s86 = sor.u32 %s84, %s85
      %p87 = scmp.eq.s32.totalorder %s86, 0
      %s89 = sadd.s32 %s88, 1
      %s90 = scalar_select %p87, %s88, %s89
      %p93 = pneg %p87
      %p94 = scmp.eq.s32.totalorder %s15, 1
      %p95 = por %p93, %p94
      %p96 = scmp.ne.s32.totalorder %s88, %s91
      %p97 = scmp.eq.s32.totalorder %s15, 0
      %p98 = por %p96, %p97
      %p99 = scmp.ne.s32.totalorder %s88, %s91
      %p100 = scmp.eq.s32.totalorder %s20, 1
      %p101 = por %p99, %p100
      %p102 = scmp.ne.s32.totalorder %s91, %s92
      %p103 = scmp.eq.s32.totalorder %s20, 0
      %p104 = por %p102, %p103
      %p105 = scmp.ne.s32.totalorder %s91, %s92
      %p106 = scmp.eq.s32.totalorder %s21, 1
      %p107 = por %p105, %p106
      %p109 = scmp.ne.s32.totalorder %s92, %s108
      %p110 = scmp.eq.s32.totalorder %s21, 0
      %p111 = por %p109, %p110
      %p112 = scmp.le.s32.totalorder 1, %s15
      %p113 = scmp.lt.s32.totalorder %s15, 3
      %p114 = pnand %p112, %p113
      %p115 = pneg %p114
      // Predicated region
      $region9: #{tpu_custom_call.1} parent=5 // pred_check
        _
      $region10: #{tpu_custom_call.1} parent=5 // pred_check_branch
        %117 = sbr.rel (%p114) target = $region12
      $region11: #{tpu_custom_call.1} parent=5 // pred_region
        %s118 = ssub.s32 %s15, 1
        // Predicated region
        $region13: #{tpu_custom_call.1} parent=11 // pred_check
          %p119 = pneg %p76
        $region14: #{tpu_custom_call.1} parent=11 // pred_check_branch
          %121 = sbr.rel (%p119) target = $region16
        $region15: #{tpu_custom_call.1} parent=11 // pred_region
          %123 = vsyncadd [#allocation6], 0
          %s124 = sshll.u32 %s1, 4
          %s125 = int_to_ptr.hbm [resolvable:$true] %s124
          %s126 = sshll.u32 [#allocation5], 4
          %s127 = int_to_ptr.vmem [resolvable:$true] %s126
          %132 = dma.hbm_to_vmem [thread:$0]  %s125, 16384, %s127, [#allocation6], 256, 256, 16
        $region16: #{tpu_custom_call.1} parent=11 // pred_fallthru
          _
      $region12: #{tpu_custom_call.1} parent=5 // pred_fallthru
        _
      %p133 = scmp.lt.s32.totalorder %s15, 2
      // Predicated region
      $region17: #{tpu_custom_call.1} parent=5 // pred_check
        %p134 = pneg %p133
      $region18: #{tpu_custom_call.1} parent=5 // pred_check_branch
        %136 = sbr.rel (%p134) target = $region20
      $region19: #{tpu_custom_call.1} parent=5 // pred_region
        // Predicated region
        $region21: #{tpu_custom_call.1} parent=19 // pred_check
          %p137 = pneg %p49
        $region22: #{tpu_custom_call.1} parent=19 // pred_check_branch
          %139 = sbr.rel (%p137) target = $region24
        $region23: #{tpu_custom_call.1} parent=19 // pred_region
          %s140 = sand.u32 %s39, 1
          %s141 = scalar_lea.sflag [#allocation3], %s140
          %s142 = sand.u32 %s39, 1
          %s143 = smul.addr %s142, 8
          %s144 = scalar_lea.vmem [#allocation2], %s143
          %146 = vsyncadd %s141, 0
          %s147 = smul.addr %s22, 4
          %s148 = sadd.s32 %s23, %s147
          %s149 = smul.addr %s148, 2
          %s150 = scalar_lea.hbm %s0, %s149
          %s151 = sshll.u32 %s150, 4
          %s152 = int_to_ptr.hbm [resolvable:$true] %s151
          %s153 = sshll.u32 %s144, 4
          %s154 = int_to_ptr.vmem [resolvable:$true] %s153
          %159 = dma.hbm_to_vmem [thread:$0]  %s152, 128, %s154, %s141, 32, 32, 2
        $region24: #{tpu_custom_call.1} parent=19 // pred_fallthru
          _
      $region20: #{tpu_custom_call.1} parent=5 // pred_fallthru
        _
      %p160 = scmp.le.s32.totalorder 1, %s15
      %p161 = scmp.lt.s32.totalorder %s15, 3
      %p162 = pnand %p160, %p161
      %p163 = pneg %p162
      // Predicated region
      $region25: #{tpu_custom_call.1} parent=5 // pred_check
        _
      $region26: #{tpu_custom_call.1} parent=5 // pred_check_branch
        %165 = sbr.rel (%p162) target = $region28
      $region27: #{tpu_custom_call.1} parent=5 // pred_region
        %s166 = ssub.s32 %s15, 1
        %s167 = sand.u32 %s42, 1
        %s168 = scalar_lea.sflag [#allocation3], %s167
        %s169 = sand.u32 %s42, 1
        %s170 = smul.addr %s169, 8
        %s171 = scalar_lea.vmem [#allocation2], %s170
        // Predicated region
        $region29: #{tpu_custom_call.1} parent=27 // pred_check
          %p172 = pneg %p55
        $region30: #{tpu_custom_call.1} parent=27 // pred_check_branch
          %174 = sbr.rel (%p172) target = $region32
        $region31: #{tpu_custom_call.1} parent=27 // pred_region
          %176 = dma.done %s168, 128
        $region32: #{tpu_custom_call.1} parent=27 // pred_fallthru
          _
        // Predicated region
        $region33: #{tpu_custom_call.1} parent=27 // pred_check
          %p177 = pneg %p76
        $region34: #{tpu_custom_call.1} parent=27 // pred_check_branch
          %179 = sbr.rel (%p177) target = $region36
        $region35: #{tpu_custom_call.1} parent=27 // pred_region
          %181 = dma.done [#allocation6], 16384
        $region36: #{tpu_custom_call.1} parent=27 // pred_fallthru
          _
        %s182 = sand.u32 %s42, 1
        %s183 = scalar_lea.sflag [#allocation3], %s182
        %s184 = sand.u32 %s42, 1
        %s185 = smul.addr %s184, 8
        %s186 = scalar_lea.vmem [#allocation2], %s185
        %p187 = pneg %p55
        %p188 = pneg %p52
        %p189 = pneg %p76
        %p190 = pneg %p73
        %p191 = pneg %p104
        %p192 = pneg %p101
        %s193 = sand.u32 %s91, 1
        %s194 = scalar_lea.sflag [#allocation4], %s193
        %s195 = sand.u32 %s91, 1
        %s196 = smul.addr %s195, 8
        %s197 = scalar_lea.vmem [#allocation7], %s196
        %v198 = vld [vmem:[%s171] sm:$0x3]
        %v199 = vpack.c.bf16 %v198, %v198
        %v200 = vunpack.c.l.bf16 %v199
        %v201 = vsub.f32 %v198, %v200
        %v202 = vpack.c.bf16 %v201, %v201
        %v203 = vunpack.c.l.bf16 %v202
        %v204 = vsub.f32 %v201, %v203
        %v205 = vpack.c.bf16 %v204, %v204
        %v206 = vld [vmem:[#allocation5] sm:$0xff]
        %v207 = vld [vmem:[#allocation5 + $0x8] sm:$0xff]
        %v208 = vld [vmem:[#allocation5 + $0x10] sm:$0xff]
        %v209 = vld [vmem:[#allocation5 + $0x18] sm:$0xff]
        %v210 = vld [vmem:[#allocation5 + $0x20] sm:$0xff]
        %v211 = vld [vmem:[#allocation5 + $0x28] sm:$0xff]
        %v212 = vld [vmem:[#allocation5 + $0x30] sm:$0xff]
        %v213 = vld [vmem:[#allocation5 + $0x38] sm:$0xff]
        %v214 = vld [vmem:[#allocation5 + $0x40] sm:$0xff]
        %v215 = vld [vmem:[#allocation5 + $0x48] sm:$0xff]
        %v216 = vld [vmem:[#allocation5 + $0x50] sm:$0xff]
        %v217 = vld [vmem:[#allocation5 + $0x58] sm:$0xff]
        %v218 = vld [vmem:[#allocation5 + $0x60] sm:$0xff]
        %v219 = vld [vmem:[#allocation5 + $0x68] sm:$0xff]
        %v220 = vld [vmem:[#allocation5 + $0x70] sm:$0xff]
        %v221 = vld [vmem:[#allocation5 + $0x78] sm:$0xff]
        %v222 = vld [vmem:[#allocation5 + $0x80] sm:$0xff]
        %v223 = vld [vmem:[#allocation5 + $0x88] sm:$0xff]
        %v224 = vld [vmem:[#allocation5 + $0x90] sm:$0xff]
        %v225 = vld [vmem:[#allocation5 + $0x98] sm:$0xff]
        %v226 = vld [vmem:[#allocation5 + $0xa0] sm:$0xff]
        %v227 = vld [vmem:[#allocation5 + $0xa8] sm:$0xff]
        %v228 = vld [vmem:[#allocation5 + $0xb0] sm:$0xff]
        %v229 = vld [vmem:[#allocation5 + $0xb8] sm:$0xff]
        %v230 = vld [vmem:[#allocation5 + $0xc0] sm:$0xff]
        %v231 = vld [vmem:[#allocation5 + $0xc8] sm:$0xff]
        %v232 = vld [vmem:[#allocation5 + $0xd0] sm:$0xff]
        %v233 = vld [vmem:[#allocation5 + $0xd8] sm:$0xff]
        %v234 = vld [vmem:[#allocation5 + $0xe0] sm:$0xff]
        %v235 = vld [vmem:[#allocation5 + $0xe8] sm:$0xff]
        %v236 = vld [vmem:[#allocation5 + $0xf0] sm:$0xff]
        %v237 = vld [vmem:[#allocation5 + $0xf8] sm:$0xff]
        %v270 = vunpack.c.l.b16 %v206
        %v271 = vunpack.c.h.b16 %v206
        %v272 = vunpack.c.l.b16 %v207
        %v273 = vunpack.c.h.b16 %v207
        %v274 = vunpack.c.l.b16 %v208
        %v275 = vunpack.c.h.b16 %v208
        %v276 = vunpack.c.l.b16 %v209
        %v277 = vunpack.c.h.b16 %v209
        %v278 = vunpack.c.l.b16 %v210
        %v279 = vunpack.c.h.b16 %v210
        %v280 = vunpack.c.l.b16 %v211
        %v281 = vunpack.c.h.b16 %v211
        %v282 = vunpack.c.l.b16 %v212
        %v283 = vunpack.c.h.b16 %v212
        %v284 = vunpack.c.l.b16 %v213
        %v285 = vunpack.c.h.b16 %v213
        %v286 = vunpack.c.l.b16 %v214
        %v287 = vunpack.c.h.b16 %v214
        %v288 = vunpack.c.l.b16 %v215
        %v289 = vunpack.c.h.b16 %v215
        %v290 = vunpack.c.l.b16 %v216
        %v291 = vunpack.c.h.b16 %v216
        %v292 = vunpack.c.l.b16 %v217
        %v293 = vunpack.c.h.b16 %v217
        %v294 = vunpack.c.l.b16 %v218
        %v295 = vunpack.c.h.b16 %v218
        %v296 = vunpack.c.l.b16 %v219
        %v297 = vunpack.c.h.b16 %v219
        %v298 = vunpack.c.l.b16 %v220
        %v299 = vunpack.c.h.b16 %v220
        %v300 = vunpack.c.l.b16 %v221
        %v301 = vunpack.c.h.b16 %v221
        %v302 = vunpack.c.l.b16 %v222
        %v303 = vunpack.c.h.b16 %v222
        %v304 = vunpack.c.l.b16 %v223
        %v305 = vunpack.c.h.b16 %v223
        %v306 = vunpack.c.l.b16 %v224
        %v307 = vunpack.c.h.b16 %v224
        %v308 = vunpack.c.l.b16 %v225
        %v309 = vunpack.c.h.b16 %v225
        %v310 = vunpack.c.l.b16 %v226
        %v311 = vunpack.c.h.b16 %v226
        %v312 = vunpack.c.l.b16 %v227
        %v313 = vunpack.c.h.b16 %v227
        %v314 = vunpack.c.l.b16 %v228
        %v315 = vunpack.c.h.b16 %v228
        %v316 = vunpack.c.l.b16 %v229
        %v317 = vunpack.c.h.b16 %v229
        %v318 = vunpack.c.l.b16 %v230
        %v319 = vunpack.c.h.b16 %v230
        %v320 = vunpack.c.l.b16 %v231
        %v321 = vunpack.c.h.b16 %v231
        %v322 = vunpack.c.l.b16 %v232
        %v323 = vunpack.c.h.b16 %v232
        %v324 = vunpack.c.l.b16 %v233
        %v325 = vunpack.c.h.b16 %v233
        %v326 = vunpack.c.l.b16 %v234
        %v327 = vunpack.c.h.b16 %v234
        %v328 = vunpack.c.l.b16 %v235
        %v329 = vunpack.c.h.b16 %v235
        %v330 = vunpack.c.l.b16 %v236
        %v331 = vunpack.c.h.b16 %v236
        %v332 = vunpack.c.l.b16 %v237
        %v333 = vunpack.c.h.b16 %v237
        %v334 = vpack.c.b16 %v274, %v270
        %v335 = vpack.c.b16 %v275, %v271
        %v336 = vpack.c.b16 %v276, %v272
        %v337 = vpack.c.b16 %v277, %v273
        %v338 = vpack.c.b16 %v282, %v278
        %v339 = vpack.c.b16 %v283, %v279
        %v340 = vpack.c.b16 %v284, %v280
        %v341 = vpack.c.b16 %v285, %v281
        %v342 = vpack.c.b16 %v290, %v286
        %v343 = vpack.c.b16 %v291, %v287
        %v344 = vpack.c.b16 %v292, %v288
        %v345 = vpack.c.b16 %v293, %v289
        %v346 = vpack.c.b16 %v298, %v294
        %v347 = vpack.c.b16 %v299, %v295
        %v348 = vpack.c.b16 %v300, %v296
        %v349 = vpack.c.b16 %v301, %v297
        %v350 = vpack.c.b16 %v306, %v302
        %v351 = vpack.c.b16 %v307, %v303
        %v352 = vpack.c.b16 %v308, %v304
        %v353 = vpack.c.b16 %v309, %v305
        %v354 = vpack.c.b16 %v314, %v310
        %v355 = vpack.c.b16 %v315, %v311
        %v356 = vpack.c.b16 %v316, %v312
        %v357 = vpack.c.b16 %v317, %v313
        %v358 = vpack.c.b16 %v322, %v318
        %v359 = vpack.c.b16 %v323, %v319
        %v360 = vpack.c.b16 %v324, %v320
        %v361 = vpack.c.b16 %v325, %v321
        %v362 = vpack.c.b16 %v330, %v326
        %v363 = vpack.c.b16 %v331, %v327
        %v364 = vpack.c.b16 %v332, %v328
        %v365 = vpack.c.b16 %v333, %v329
        %398 = vmatpush.bf16.msra.mxu0 %v362
        %399 = vmatpush.bf16.msra.mxu0 %v358
        %400 = vmatpush.bf16.msra.mxu0 %v354
        %401 = vmatpush.bf16.msra.mxu0 %v350
        %402 = vmatpush.bf16.msra.mxu0 %v346
        %403 = vmatpush.bf16.msra.mxu0 %v342
        %404 = vmatpush.bf16.msra.mxu0 %v338
        %405 = vmatpush.bf16.msra.mxu0 %v334
        %406 = vmatmul.bf16.gmra.mxu0 %v202
        %v407 = vpop.f32.mrf.mxu0
        %v408 = vadd.f32 0.0, %v407
        %v409 = vpop.f32.mrf.mxu0
        %410 = vdwg.mxu0
        %411 = vmatpush.bf16.msra.mxu0 %v363
        %412 = vmatpush.bf16.msra.mxu0 %v359
        %413 = vmatpush.bf16.msra.mxu0 %v355
        %414 = vmatpush.bf16.msra.mxu0 %v351
        %415 = vmatpush.bf16.msra.mxu0 %v347
        %416 = vmatpush.bf16.msra.mxu0 %v343
        %417 = vmatpush.bf16.msra.mxu0 %v339
        %418 = vmatpush.bf16.msra.mxu0 %v335
        %419 = vmatmul.bf16.gmra.mxu0 %v202
        %v420 = vpop.f32.mrf.mxu0
        %v421 = vadd.f32 0.0, %v420
        %v422 = vpop.f32.mrf.mxu0
        %423 = vdwg.mxu0
        %424 = vmatpush.bf16.msra.mxu0 %v364
        %425 = vmatpush.bf16.msra.mxu0 %v360
        %426 = vmatpush.bf16.msra.mxu0 %v356
        %427 = vmatpush.bf16.msra.mxu0 %v352
        %428 = vmatpush.bf16.msra.mxu0 %v348
        %429 = vmatpush.bf16.msra.mxu0 %v344
        %430 = vmatpush.bf16.msra.mxu0 %v340
        %431 = vmatpush.bf16.msra.mxu0 %v336
        %432 = vmatmul.bf16.gmra.mxu0 %v202
        %v433 = vpop.f32.mrf.mxu0
        %v434 = vadd.f32 0.0, %v433
        %v435 = vpop.f32.mrf.mxu0
        %436 = vdwg.mxu0
        %437 = vmatpush.bf16.msra.mxu0 %v365
        %438 = vmatpush.bf16.msra.mxu0 %v361
        %439 = vmatpush.bf16.msra.mxu0 %v357
        %440 = vmatpush.bf16.msra.mxu0 %v353
        %441 = vmatpush.bf16.msra.mxu0 %v349
        %442 = vmatpush.bf16.msra.mxu0 %v345
        %443 = vmatpush.bf16.msra.mxu0 %v341
        %444 = vmatpush.bf16.msra.mxu0 %v337
        %445 = vmatmul.bf16.gmra.mxu0 %v202
        %v446 = vpop.f32.mrf.mxu0
        %v447 = vadd.f32 0.0, %v446
        %v448 = vpop.f32.mrf.mxu0
        %449 = vdwg.mxu0
        %450 = vmatpush.bf16.msra.mxu0 %v362
        %451 = vmatpush.bf16.msra.mxu0 %v358
        %452 = vmatpush.bf16.msra.mxu0 %v354
        %453 = vmatpush.bf16.msra.mxu0 %v350
        %454 = vmatpush.bf16.msra.mxu0 %v346
        %455 = vmatpush.bf16.msra.mxu0 %v342
        %456 = vmatpush.bf16.msra.mxu0 %v338
        %457 = vmatpush.bf16.msra.mxu0 %v334
        %458 = vmatmul.bf16.gmra.mxu0 %v199
        %v459 = vpop.f32.mrf.mxu0
        %v460 = vadd.f32 %v408, %v459
        %v461 = vpop.f32.mrf.mxu0
        %462 = vdwg.mxu0
        %463 = vmatpush.bf16.msra.mxu0 %v363
        %464 = vmatpush.bf16.msra.mxu0 %v359
        %465 = vmatpush.bf16.msra.mxu0 %v355
        %466 = vmatpush.bf16.msra.mxu0 %v351
        %467 = vmatpush.bf16.msra.mxu0 %v347
        %468 = vmatpush.bf16.msra.mxu0 %v343
        %469 = vmatpush.bf16.msra.mxu0 %v339
        %470 = vmatpush.bf16.msra.mxu0 %v335
        %471 = vmatmul.bf16.gmra.mxu0 %v199
        %v472 = vpop.f32.mrf.mxu0
        %v473 = vadd.f32 %v421, %v472
        %v474 = vpop.f32.mrf.mxu0
        %475 = vdwg.mxu0
        %476 = vmatpush.bf16.msra.mxu0 %v364
        %477 = vmatpush.bf16.msra.mxu0 %v360
        %478 = vmatpush.bf16.msra.mxu0 %v356
        %479 = vmatpush.bf16.msra.mxu0 %v352
        %480 = vmatpush.bf16.msra.mxu0 %v348
        %481 = vmatpush.bf16.msra.mxu0 %v344
        %482 = vmatpush.bf16.msra.mxu0 %v340
        %483 = vmatpush.bf16.msra.mxu0 %v336
        %484 = vmatmul.bf16.gmra.mxu0 %v199
        %v485 = vpop.f32.mrf.mxu0
        %v486 = vadd.f32 %v434, %v485
        %v487 = vpop.f32.mrf.mxu0
        %488 = vdwg.mxu0
        %489 = vmatpush.bf16.msra.mxu0 %v365
        %490 = vmatpush.bf16.msra.mxu0 %v361
        %491 = vmatpush.bf16.msra.mxu0 %v357
        %492 = vmatpush.bf16.msra.mxu0 %v353
        %493 = vmatpush.bf16.msra.mxu0 %v349
        %494 = vmatpush.bf16.msra.mxu0 %v345
        %495 = vmatpush.bf16.msra.mxu0 %v341
        %496 = vmatpush.bf16.msra.mxu0 %v337
        %497 = vmatmul.bf16.gmra.mxu0 %v199
        %v498 = vpop.f32.mrf.mxu0
        %v499 = vadd.f32 %v447, %v498
        %v500 = vpop.f32.mrf.mxu0
        %501 = vdwg.mxu0
        %502 = vmatpush.bf16.msra.mxu0 %v362
        %503 = vmatpush.bf16.msra.mxu0 %v358
        %504 = vmatpush.bf16.msra.mxu0 %v354
        %505 = vmatpush.bf16.msra.mxu0 %v350
        %506 = vmatpush.bf16.msra.mxu0 %v346
        %507 = vmatpush.bf16.msra.mxu0 %v342
        %508 = vmatpush.bf16.msra.mxu0 %v338
        %509 = vmatpush.bf16.msra.mxu0 %v334
        %510 = vmatmul.bf16.gmra.mxu0 %v205
        %v511 = vpop.f32.mrf.mxu0
        %v512 = vadd.f32 0.0, %v511
        %v513 = vpop.f32.mrf.mxu0
        %514 = vdwg.mxu0
        %515 = vmatpush.bf16.msra.mxu0 %v363
        %516 = vmatpush.bf16.msra.mxu0 %v359
        %517 = vmatpush.bf16.msra.mxu0 %v355
        %518 = vmatpush.bf16.msra.mxu0 %v351
        %519 = vmatpush.bf16.msra.mxu0 %v347
        %520 = vmatpush.bf16.msra.mxu0 %v343
        %521 = vmatpush.bf16.msra.mxu0 %v339
        %522 = vmatpush.bf16.msra.mxu0 %v335
        %523 = vmatmul.bf16.gmra.mxu0 %v205
        %v524 = vpop.f32.mrf.mxu0
        %v525 = vadd.f32 0.0, %v524
        %v526 = vpop.f32.mrf.mxu0
        %527 = vdwg.mxu0
        %528 = vmatpush.bf16.msra.mxu0 %v364
        %529 = vmatpush.bf16.msra.mxu0 %v360
        %530 = vmatpush.bf16.msra.mxu0 %v356
        %531 = vmatpush.bf16.msra.mxu0 %v352
        %532 = vmatpush.bf16.msra.mxu0 %v348
        %533 = vmatpush.bf16.msra.mxu0 %v344
        %534 = vmatpush.bf16.msra.mxu0 %v340
        %535 = vmatpush.bf16.msra.mxu0 %v336
        %536 = vmatmul.bf16.gmra.mxu0 %v205
        %v537 = vpop.f32.mrf.mxu0
        %v538 = vadd.f32 0.0, %v537
        %v539 = vpop.f32.mrf.mxu0
        %540 = vdwg.mxu0
        %541 = vmatpush.bf16.msra.mxu0 %v365
        %542 = vmatpush.bf16.msra.mxu0 %v361
        %543 = vmatpush.bf16.msra.mxu0 %v357
        %544 = vmatpush.bf16.msra.mxu0 %v353
        %545 = vmatpush.bf16.msra.mxu0 %v349
        %546 = vmatpush.bf16.msra.mxu0 %v345
        %547 = vmatpush.bf16.msra.mxu0 %v341
        %548 = vmatpush.bf16.msra.mxu0 %v337
        %549 = vmatmul.bf16.gmra.mxu0 %v205
        %v550 = vpop.f32.mrf.mxu0
        %v551 = vadd.f32 0.0, %v550
        %v552 = vpop.f32.mrf.mxu0
        %553 = vdwg.mxu0
        %v554 = vadd.f32 %v460, %v512
        %v555 = vadd.f32 %v473, %v525
        %v556 = vadd.f32 %v486, %v538
        %v557 = vadd.f32 %v499, %v551
        %s558 = scalar_lea.vmem %s171, 2 [#allocation2]
        %v559 = vld [vmem:[%s558] sm:$0x3]
        %v560 = vpack.c.bf16 %v559, %v559
        %v561 = vunpack.c.l.bf16 %v560
        %v562 = vsub.f32 %v559, %v561
        %v563 = vpack.c.bf16 %v562, %v562
        %v564 = vunpack.c.l.bf16 %v563
        %v565 = vsub.f32 %v562, %v564
        %v566 = vpack.c.bf16 %v565, %v565
        %s567 = scalar_lea.vmem [#allocation5], 256
        %v568 = vld [vmem:[%s567] sm:$0xff]
        %v569 = vld [vmem:[%s567 + $0x8] sm:$0xff]
        %v570 = vld [vmem:[%s567 + $0x10] sm:$0xff]
        %v571 = vld [vmem:[%s567 + $0x18] sm:$0xff]
        %v572 = vld [vmem:[%s567 + $0x20] sm:$0xff]
        %v573 = vld [vmem:[%s567 + $0x28] sm:$0xff]
        %v574 = vld [vmem:[%s567 + $0x30] sm:$0xff]
        %v575 = vld [vmem:[%s567 + $0x38] sm:$0xff]
        %v576 = vld [vmem:[%s567 + $0x40] sm:$0xff]
        %v577 = vld [vmem:[%s567 + $0x48] sm:$0xff]
        %v578 = vld [vmem:[%s567 + $0x50] sm:$0xff]
        %v579 = vld [vmem:[%s567 + $0x58] sm:$0xff]
        %v580 = vld [vmem:[%s567 + $0x60] sm:$0xff]
        %v581 = vld [vmem:[%s567 + $0x68] sm:$0xff]
        %v582 = vld [vmem:[%s567 + $0x70] sm:$0xff]
        %v583 = vld [vmem:[%s567 + $0x78] sm:$0xff]
        %v584 = vld [vmem:[%s567 + $0x80] sm:$0xff]
        %v585 = vld [vmem:[%s567 + $0x88] sm:$0xff]
        %v586 = vld [vmem:[%s567 + $0x90] sm:$0xff]
        %v587 = vld [vmem:[%s567 + $0x98] sm:$0xff]
        %v588 = vld [vmem:[%s567 + $0xa0] sm:$0xff]
        %v589 = vld [vmem:[%s567 + $0xa8] sm:$0xff]
        %v590 = vld [vmem:[%s567 + $0xb0] sm:$0xff]
        %v591 = vld [vmem:[%s567 + $0xb8] sm:$0xff]
        %v592 = vld [vmem:[%s567 + $0xc0] sm:$0xff]
        %v593 = vld [vmem:[%s567 + $0xc8] sm:$0xff]
        %v594 = vld [vmem:[%s567 + $0xd0] sm:$0xff]
        %v595 = vld [vmem:[%s567 + $0xd8] sm:$0xff]
        %v596 = vld [vmem:[%s567 + $0xe0] sm:$0xff]
        %v597 = vld [vmem:[%s567 + $0xe8] sm:$0xff]
        %v598 = vld [vmem:[%s567 + $0xf0] sm:$0xff]
        %v599 = vld [vmem:[%s567 + $0xf8] sm:$0xff]
        %v632 = vunpack.c.l.b16 %v568
        %v633 = vunpack.c.h.b16 %v568
        %v634 = vunpack.c.l.b16 %v569
        %v635 = vunpack.c.h.b16 %v569
        %v636 = vunpack.c.l.b16 %v570
        %v637 = vunpack.c.h.b16 %v570
        %v638 = vunpack.c.l.b16 %v571
        %v639 = vunpack.c.h.b16 %v571
        %v640 = vunpack.c.l.b16 %v572
        %v641 = vunpack.c.h.b16 %v572
        %v642 = vunpack.c.l.b16 %v573
        %v643 = vunpack.c.h.b16 %v573
        %v644 = vunpack.c.l.b16 %v574
        %v645 = vunpack.c.h.b16 %v574
        %v646 = vunpack.c.l.b16 %v575
        %v647 = vunpack.c.h.b16 %v575
        %v648 = vunpack.c.l.b16 %v576
        %v649 = vunpack.c.h.b16 %v576
        %v650 = vunpack.c.l.b16 %v577
        %v651 = vunpack.c.h.b16 %v577
        %v652 = vunpack.c.l.b16 %v578
        %v653 = vunpack.c.h.b16 %v578
        %v654 = vunpack.c.l.b16 %v579
        %v655 = vunpack.c.h.b16 %v579
        %v656 = vunpack.c.l.b16 %v580
        %v657 = vunpack.c.h.b16 %v580
        %v658 = vunpack.c.l.b16 %v581
        %v659 = vunpack.c.h.b16 %v581
        %v660 = vunpack.c.l.b16 %v582
        %v661 = vunpack.c.h.b16 %v582
        %v662 = vunpack.c.l.b16 %v583
        %v663 = vunpack.c.h.b16 %v583
        %v664 = vunpack.c.l.b16 %v584
        %v665 = vunpack.c.h.b16 %v584
        %v666 = vunpack.c.l.b16 %v585
        %v667 = vunpack.c.h.b16 %v585
        %v668 = vunpack.c.l.b16 %v586
        %v669 = vunpack.c.h.b16 %v586
        %v670 = vunpack.c.l.b16 %v587
        %v671 = vunpack.c.h.b16 %v587
        %v672 = vunpack.c.l.b16 %v588
        %v673 = vunpack.c.h.b16 %v588
        %v674 = vunpack.c.l.b16 %v589
        %v675 = vunpack.c.h.b16 %v589
        %v676 = vunpack.c.l.b16 %v590
        %v677 = vunpack.c.h.b16 %v590
        %v678 = vunpack.c.l.b16 %v591
        %v679 = vunpack.c.h.b16 %v591
        %v680 = vunpack.c.l.b16 %v592
        %v681 = vunpack.c.h.b16 %v592
        %v682 = vunpack.c.l.b16 %v593
        %v683 = vunpack.c.h.b16 %v593
        %v684 = vunpack.c.l.b16 %v594
        %v685 = vunpack.c.h.b16 %v594
        %v686 = vunpack.c.l.b16 %v595
        %v687 = vunpack.c.h.b16 %v595
        %v688 = vunpack.c.l.b16 %v596
        %v689 = vunpack.c.h.b16 %v596
        %v690 = vunpack.c.l.b16 %v597
        %v691 = vunpack.c.h.b16 %v597
        %v692 = vunpack.c.l.b16 %v598
        %v693 = vunpack.c.h.b16 %v598
        %v694 = vunpack.c.l.b16 %v599
        %v695 = vunpack.c.h.b16 %v599
        %v696 = vpack.c.b16 %v636, %v632
        %v697 = vpack.c.b16 %v637, %v633
        %v698 = vpack.c.b16 %v638, %v634
        %v699 = vpack.c.b16 %v639, %v635
        %v700 = vpack.c.b16 %v644, %v640
        %v701 = vpack.c.b16 %v645, %v641
        %v702 = vpack.c.b16 %v646, %v642
        %v703 = vpack.c.b16 %v647, %v643
        %v704 = vpack.c.b16 %v652, %v648
        %v705 = vpack.c.b16 %v653, %v649
        %v706 = vpack.c.b16 %v654, %v650
        %v707 = vpack.c.b16 %v655, %v651
        %v708 = vpack.c.b16 %v660, %v656
        %v709 = vpack.c.b16 %v661, %v657
        %v710 = vpack.c.b16 %v662, %v658
        %v711 = vpack.c.b16 %v663, %v659
        %v712 = vpack.c.b16 %v668, %v664
        %v713 = vpack.c.b16 %v669, %v665
        %v714 = vpack.c.b16 %v670, %v666
        %v715 = vpack.c.b16 %v671, %v667
        %v716 = vpack.c.b16 %v676, %v672
        %v717 = vpack.c.b16 %v677, %v673
        %v718 = vpack.c.b16 %v678, %v674
        %v719 = vpack.c.b16 %v679, %v675
        %v720 = vpack.c.b16 %v684, %v680
        %v721 = vpack.c.b16 %v685, %v681
        %v722 = vpack.c.b16 %v686, %v682
        %v723 = vpack.c.b16 %v687, %v683
        %v724 = vpack.c.b16 %v692, %v688
        %v725 = vpack.c.b16 %v693, %v689
        %v726 = vpack.c.b16 %v694, %v690
        %v727 = vpack.c.b16 %v695, %v691
        %760 = vmatpush.bf16.msra.mxu0 %v724
        %761 = vmatpush.bf16.msra.mxu0 %v720
        %762 = vmatpush.bf16.msra.mxu0 %v716
        %763 = vmatpush.bf16.msra.mxu0 %v712
        %764 = vmatpush.bf16.msra.mxu0 %v708
        %765 = vmatpush.bf16.msra.mxu0 %v704
        %766 = vmatpush.bf16.msra.mxu0 %v700
        %767 = vmatpush.bf16.msra.mxu0 %v696
        %768 = vmatmul.bf16.gmra.mxu0 %v560
        %v769 = vpop.f32.mrf.mxu0
        %v770 = vadd.f32 0.0, %v769
        %v771 = vpop.f32.mrf.mxu0
        %772 = vdwg.mxu0
        %773 = vmatpush.bf16.msra.mxu0 %v725
        %774 = vmatpush.bf16.msra.mxu0 %v721
        %775 = vmatpush.bf16.msra.mxu0 %v717
        %776 = vmatpush.bf16.msra.mxu0 %v713
        %777 = vmatpush.bf16.msra.mxu0 %v709
        %778 = vmatpush.bf16.msra.mxu0 %v705
        %779 = vmatpush.bf16.msra.mxu0 %v701
        %780 = vmatpush.bf16.msra.mxu0 %v697
        %781 = vmatmul.bf16.gmra.mxu0 %v560
        %v782 = vpop.f32.mrf.mxu0
        %v783 = vadd.f32 0.0, %v782
        %v784 = vpop.f32.mrf.mxu0
        %785 = vdwg.mxu0
        %786 = vmatpush.bf16.msra.mxu0 %v726
        %787 = vmatpush.bf16.msra.mxu0 %v722
        %788 = vmatpush.bf16.msra.mxu0 %v718
        %789 = vmatpush.bf16.msra.mxu0 %v714
        %790 = vmatpush.bf16.msra.mxu0 %v710
        %791 = vmatpush.bf16.msra.mxu0 %v706
        %792 = vmatpush.bf16.msra.mxu0 %v702
        %793 = vmatpush.bf16.msra.mxu0 %v698
        %794 = vmatmul.bf16.gmra.mxu0 %v560
        %v795 = vpop.f32.mrf.mxu0
        %v796 = vadd.f32 0.0, %v795
        %v797 = vpop.f32.mrf.mxu0
        %798 = vdwg.mxu0
        %799 = vmatpush.bf16.msra.mxu0 %v727
        %800 = vmatpush.bf16.msra.mxu0 %v723
        %801 = vmatpush.bf16.msra.mxu0 %v719
        %802 = vmatpush.bf16.msra.mxu0 %v715
        %803 = vmatpush.bf16.msra.mxu0 %v711
        %804 = vmatpush.bf16.msra.mxu0 %v707
        %805 = vmatpush.bf16.msra.mxu0 %v703
        %806 = vmatpush.bf16.msra.mxu0 %v699
        %807 = vmatmul.bf16.gmra.mxu0 %v560
        %v808 = vpop.f32.mrf.mxu0
        %v809 = vadd.f32 0.0, %v808
        %v810 = vpop.f32.mrf.mxu0
        %811 = vdwg.mxu0
        %v812 = vadd.f32 %v554, %v770
        %v813 = vadd.f32 %v555, %v783
        %v814 = vadd.f32 %v556, %v796
        %v815 = vadd.f32 %v557, %v809
        %816 = vmatpush.bf16.msra.mxu0 %v724
        %817 = vmatpush.bf16.msra.mxu0 %v720
        %818 = vmatpush.bf16.msra.mxu0 %v716
        %819 = vmatpush.bf16.msra.mxu0 %v712
        %820 = vmatpush.bf16.msra.mxu0 %v708
        %821 = vmatpush.bf16.msra.mxu0 %v704
        %822 = vmatpush.bf16.msra.mxu0 %v700
        %823 = vmatpush.bf16.msra.mxu0 %v696
        %824 = vmatmul.bf16.gmra.mxu0 %v563
        %v825 = vpop.f32.mrf.mxu0
        %v826 = vadd.f32 0.0, %v825
        %v827 = vpop.f32.mrf.mxu0
        %828 = vdwg.mxu0
        %829 = vmatpush.bf16.msra.mxu0 %v725
        %830 = vmatpush.bf16.msra.mxu0 %v721
        %831 = vmatpush.bf16.msra.mxu0 %v717
        %832 = vmatpush.bf16.msra.mxu0 %v713
        %833 = vmatpush.bf16.msra.mxu0 %v709
        %834 = vmatpush.bf16.msra.mxu0 %v705
        %835 = vmatpush.bf16.msra.mxu0 %v701
        %836 = vmatpush.bf16.msra.mxu0 %v697
        %837 = vmatmul.bf16.gmra.mxu0 %v563
        %v838 = vpop.f32.mrf.mxu0
        %v839 = vadd.f32 0.0, %v838
        %v840 = vpop.f32.mrf.mxu0
        %841 = vdwg.mxu0
        %842 = vmatpush.bf16.msra.mxu0 %v726
        %843 = vmatpush.bf16.msra.mxu0 %v722
        %844 = vmatpush.bf16.msra.mxu0 %v718
        %845 = vmatpush.bf16.msra.mxu0 %v714
        %846 = vmatpush.bf16.msra.mxu0 %v710
        %847 = vmatpush.bf16.msra.mxu0 %v706
        %848 = vmatpush.bf16.msra.mxu0 %v702
        %849 = vmatpush.bf16.msra.mxu0 %v698
        %850 = vmatmul.bf16.gmra.mxu0 %v563
        %v851 = vpop.f32.mrf.mxu0
        %v852 = vadd.f32 0.0, %v851
        %v853 = vpop.f32.mrf.mxu0
        %854 = vdwg.mxu0
        %855 = vmatpush.bf16.msra.mxu0 %v727
        %856 = vmatpush.bf16.msra.mxu0 %v723
        %857 = vmatpush.bf16.msra.mxu0 %v719
        %858 = vmatpush.bf16.msra.mxu0 %v715
        %859 = vmatpush.bf16.msra.mxu0 %v711
        %860 = vmatpush.bf16.msra.mxu0 %v707
        %861 = vmatpush.bf16.msra.mxu0 %v703
        %862 = vmatpush.bf16.msra.mxu0 %v699
        %863 = vmatmul.bf16.gmra.mxu0 %v563
        %v864 = vpop.f32.mrf.mxu0
        %v865 = vadd.f32 0.0, %v864
        %v866 = vpop.f32.mrf.mxu0
        %867 = vdwg.mxu0
        %v868 = vadd.f32 %v812, %v826
        %v869 = vadd.f32 %v813, %v839
        %v870 = vadd.f32 %v814, %v852
        %v871 = vadd.f32 %v815, %v865
        %872 = vmatpush.bf16.msra.mxu0 %v724
        %873 = vmatpush.bf16.msra.mxu0 %v720
        %874 = vmatpush.bf16.msra.mxu0 %v716
        %875 = vmatpush.bf16.msra.mxu0 %v712
        %876 = vmatpush.bf16.msra.mxu0 %v708
        %877 = vmatpush.bf16.msra.mxu0 %v704
        %878 = vmatpush.bf16.msra.mxu0 %v700
        %879 = vmatpush.bf16.msra.mxu0 %v696
        %880 = vmatmul.bf16.gmra.mxu0 %v566
        %v881 = vpop.f32.mrf.mxu0
        %v882 = vadd.f32 0.0, %v881
        %v883 = vpop.f32.mrf.mxu0
        %884 = vdwg.mxu0
        %885 = vmatpush.bf16.msra.mxu0 %v725
        %886 = vmatpush.bf16.msra.mxu0 %v721
        %887 = vmatpush.bf16.msra.mxu0 %v717
        %888 = vmatpush.bf16.msra.mxu0 %v713
        %889 = vmatpush.bf16.msra.mxu0 %v709
        %890 = vmatpush.bf16.msra.mxu0 %v705
        %891 = vmatpush.bf16.msra.mxu0 %v701
        %892 = vmatpush.bf16.msra.mxu0 %v697
        %893 = vmatmul.bf16.gmra.mxu0 %v566
        %v894 = vpop.f32.mrf.mxu0
        %v895 = vadd.f32 0.0, %v894
        %v896 = vpop.f32.mrf.mxu0
        %897 = vdwg.mxu0
        %898 = vmatpush.bf16.msra.mxu0 %v726
        %899 = vmatpush.bf16.msra.mxu0 %v722
        %900 = vmatpush.bf16.msra.mxu0 %v718
        %901 = vmatpush.bf16.msra.mxu0 %v714
        %902 = vmatpush.bf16.msra.mxu0 %v710
        %903 = vmatpush.bf16.msra.mxu0 %v706
        %904 = vmatpush.bf16.msra.mxu0 %v702
        %905 = vmatpush.bf16.msra.mxu0 %v698
        %906 = vmatmul.bf16.gmra.mxu0 %v566
        %v907 = vpop.f32.mrf.mxu0
        %v908 = vadd.f32 0.0, %v907
        %v909 = vpop.f32.mrf.mxu0
        %910 = vdwg.mxu0
        %911 = vmatpush.bf16.msra.mxu0 %v727
        %912 = vmatpush.bf16.msra.mxu0 %v723
        %913 = vmatpush.bf16.msra.mxu0 %v719
        %914 = vmatpush.bf16.msra.mxu0 %v715
        %915 = vmatpush.bf16.msra.mxu0 %v711
        %916 = vmatpush.bf16.msra.mxu0 %v707
        %917 = vmatpush.bf16.msra.mxu0 %v703
        %918 = vmatpush.bf16.msra.mxu0 %v699
        %919 = vmatmul.bf16.gmra.mxu0 %v566
        %v920 = vpop.f32.mrf.mxu0
        %v921 = vadd.f32 0.0, %v920
        %v922 = vpop.f32.mrf.mxu0
        %923 = vdwg.mxu0
        %v924 = vadd.f32 %v868, %v882
        %v925 = vadd.f32 %v869, %v895
        %v926 = vadd.f32 %v870, %v908
        %v927 = vadd.f32 %v871, %v921
        %s928 = scalar_lea.vmem %s171, 4 [#allocation2]
        %v929 = vld [vmem:[%s928] sm:$0x3]
        %v930 = vpack.c.bf16 %v929, %v929
        %v931 = vunpack.c.l.bf16 %v930
        %v932 = vsub.f32 %v929, %v931
        %v933 = vpack.c.bf16 %v932, %v932
        %v934 = vunpack.c.l.bf16 %v933
        %v935 = vsub.f32 %v932, %v934
        %v936 = vpack.c.bf16 %v935, %v935
        %s937 = scalar_lea.vmem [#allocation5], 512
        %v938 = vld [vmem:[%s937] sm:$0xff]
        %v939 = vld [vmem:[%s937 + $0x8] sm:$0xff]
        %v940 = vld [vmem:[%s937 + $0x10] sm:$0xff]
        %v941 = vld [vmem:[%s937 + $0x18] sm:$0xff]
        %v942 = vld [vmem:[%s937 + $0x20] sm:$0xff]
        %v943 = vld [vmem:[%s937 + $0x28] sm:$0xff]
        %v944 = vld [vmem:[%s937 + $0x30] sm:$0xff]
        %v945 = vld [vmem:[%s937 + $0x38] sm:$0xff]
        %v946 = vld [vmem:[%s937 + $0x40] sm:$0xff]
        %v947 = vld [vmem:[%s937 + $0x48] sm:$0xff]
        %v948 = vld [vmem:[%s937 + $0x50] sm:$0xff]
        %v949 = vld [vmem:[%s937 + $0x58] sm:$0xff]
        %v950 = vld [vmem:[%s937 + $0x60] sm:$0xff]
        %v951 = vld [vmem:[%s937 + $0x68] sm:$0xff]
        %v952 = vld [vmem:[%s937 + $0x70] sm:$0xff]
        %v953 = vld [vmem:[%s937 + $0x78] sm:$0xff]
        %v954 = vld [vmem:[%s937 + $0x80] sm:$0xff]
        %v955 = vld [vmem:[%s937 + $0x88] sm:$0xff]
        %v956 = vld [vmem:[%s937 + $0x90] sm:$0xff]
        %v957 = vld [vmem:[%s937 + $0x98] sm:$0xff]
        %v958 = vld [vmem:[%s937 + $0xa0] sm:$0xff]
        %v959 = vld [vmem:[%s937 + $0xa8] sm:$0xff]
        %v960 = vld [vmem:[%s937 + $0xb0] sm:$0xff]
        %v961 = vld [vmem:[%s937 + $0xb8] sm:$0xff]
        %v962 = vld [vmem:[%s937 + $0xc0] sm:$0xff]
        %v963 = vld [vmem:[%s937 + $0xc8] sm:$0xff]
        %v964 = vld [vmem:[%s937 + $0xd0] sm:$0xff]
        %v965 = vld [vmem:[%s937 + $0xd8] sm:$0xff]
        %v966 = vld [vmem:[%s937 + $0xe0] sm:$0xff]
        %v967 = vld [vmem:[%s937 + $0xe8] sm:$0xff]
        %v968 = vld [vmem:[%s937 + $0xf0] sm:$0xff]
        %v969 = vld [vmem:[%s937 + $0xf8] sm:$0xff]
        %v1002 = vunpack.c.l.b16 %v938
        %v1003 = vunpack.c.h.b16 %v938
        %v1004 = vunpack.c.l.b16 %v939
        %v1005 = vunpack.c.h.b16 %v939
        %v1006 = vunpack.c.l.b16 %v940
        %v1007 = vunpack.c.h.b16 %v940
        %v1008 = vunpack.c.l.b16 %v941
        %v1009 = vunpack.c.h.b16 %v941
        %v1010 = vunpack.c.l.b16 %v942
        %v1011 = vunpack.c.h.b16 %v942
        %v1012 = vunpack.c.l.b16 %v943
        %v1013 = vunpack.c.h.b16 %v943
        %v1014 = vunpack.c.l.b16 %v944
        %v1015 = vunpack.c.h.b16 %v944
        %v1016 = vunpack.c.l.b16 %v945
        %v1017 = vunpack.c.h.b16 %v945
        %v1018 = vunpack.c.l.b16 %v946
        %v1019 = vunpack.c.h.b16 %v946
        %v1020 = vunpack.c.l.b16 %v947
        %v1021 = vunpack.c.h.b16 %v947
        %v1022 = vunpack.c.l.b16 %v948
        %v1023 = vunpack.c.h.b16 %v948
        %v1024 = vunpack.c.l.b16 %v949
        %v1025 = vunpack.c.h.b16 %v949
        %v1026 = vunpack.c.l.b16 %v950
        %v1027 = vunpack.c.h.b16 %v950
        %v1028 = vunpack.c.l.b16 %v951
        %v1029 = vunpack.c.h.b16 %v951
        %v1030 = vunpack.c.l.b16 %v952
        %v1031 = vunpack.c.h.b16 %v952
        %v1032 = vunpack.c.l.b16 %v953
        %v1033 = vunpack.c.h.b16 %v953
        %v1034 = vunpack.c.l.b16 %v954
        %v1035 = vunpack.c.h.b16 %v954
        %v1036 = vunpack.c.l.b16 %v955
        %v1037 = vunpack.c.h.b16 %v955
        %v1038 = vunpack.c.l.b16 %v956
        %v1039 = vunpack.c.h.b16 %v956
        %v1040 = vunpack.c.l.b16 %v957
        %v1041 = vunpack.c.h.b16 %v957
        %v1042 = vunpack.c.l.b16 %v958
        %v1043 = vunpack.c.h.b16 %v958
        %v1044 = vunpack.c.l.b16 %v959
        %v1045 = vunpack.c.h.b16 %v959
        %v1046 = vunpack.c.l.b16 %v960
        %v1047 = vunpack.c.h.b16 %v960
        %v1048 = vunpack.c.l.b16 %v961
        %v1049 = vunpack.c.h.b16 %v961
        %v1050 = vunpack.c.l.b16 %v962
        %v1051 = vunpack.c.h.b16 %v962
        %v1052 = vunpack.c.l.b16 %v963
        %v1053 = vunpack.c.h.b16 %v963
        %v1054 = vunpack.c.l.b16 %v964
        %v1055 = vunpack.c.h.b16 %v964
        %v1056 = vunpack.c.l.b16 %v965
        %v1057 = vunpack.c.h.b16 %v965
        %v1058 = vunpack.c.l.b16 %v966
        %v1059 = vunpack.c.h.b16 %v966
        %v1060 = vunpack.c.l.b16 %v967
        %v1061 = vunpack.c.h.b16 %v967
        %v1062 = vunpack.c.l.b16 %v968
        %v1063 = vunpack.c.h.b16 %v968
        %v1064 = vunpack.c.l.b16 %v969
        %v1065 = vunpack.c.h.b16 %v969
        %v1066 = vpack.c.b16 %v1006, %v1002
        %v1067 = vpack.c.b16 %v1007, %v1003
        %v1068 = vpack.c.b16 %v1008, %v1004
        %v1069 = vpack.c.b16 %v1009, %v1005
        %v1070 = vpack.c.b16 %v1014, %v1010
        %v1071 = vpack.c.b16 %v1015, %v1011
        %v1072 = vpack.c.b16 %v1016, %v1012
        %v1073 = vpack.c.b16 %v1017, %v1013
        %v1074 = vpack.c.b16 %v1022, %v1018
        %v1075 = vpack.c.b16 %v1023, %v1019
        %v1076 = vpack.c.b16 %v1024, %v1020
        %v1077 = vpack.c.b16 %v1025, %v1021
        %v1078 = vpack.c.b16 %v1030, %v1026
        %v1079 = vpack.c.b16 %v1031, %v1027
        %v1080 = vpack.c.b16 %v1032, %v1028
        %v1081 = vpack.c.b16 %v1033, %v1029
        %v1082 = vpack.c.b16 %v1038, %v1034
        %v1083 = vpack.c.b16 %v1039, %v1035
        %v1084 = vpack.c.b16 %v1040, %v1036
        %v1085 = vpack.c.b16 %v1041, %v1037
        %v1086 = vpack.c.b16 %v1046, %v1042
        %v1087 = vpack.c.b16 %v1047, %v1043
        %v1088 = vpack.c.b16 %v1048, %v1044
        %v1089 = vpack.c.b16 %v1049, %v1045
        %v1090 = vpack.c.b16 %v1054, %v1050
        %v1091 = vpack.c.b16 %v1055, %v1051
        %v1092 = vpack.c.b16 %v1056, %v1052
        %v1093 = vpack.c.b16 %v1057, %v1053
        %v1094 = vpack.c.b16 %v1062, %v1058
        %v1095 = vpack.c.b16 %v1063, %v1059
        %v1096 = vpack.c.b16 %v1064, %v1060
        %v1097 = vpack.c.b16 %v1065, %v1061
        %1130 = vmatpush.bf16.msra.mxu0 %v1094
        %1131 = vmatpush.bf16.msra.mxu0 %v1090
        %1132 = vmatpush.bf16.msra.mxu0 %v1086
        %1133 = vmatpush.bf16.msra.mxu0 %v1082
        %1134 = vmatpush.bf16.msra.mxu0 %v1078
        %1135 = vmatpush.bf16.msra.mxu0 %v1074
        %1136 = vmatpush.bf16.msra.mxu0 %v1070
        %1137 = vmatpush.bf16.msra.mxu0 %v1066
        %1138 = vmatmul.bf16.gmra.mxu0 %v930
        %v1139 = vpop.f32.mrf.mxu0
        %v1140 = vadd.f32 0.0, %v1139
        %v1141 = vpop.f32.mrf.mxu0
        %1142 = vdwg.mxu0
        %1143 = vmatpush.bf16.msra.mxu0 %v1095
        %1144 = vmatpush.bf16.msra.mxu0 %v1091
        %1145 = vmatpush.bf16.msra.mxu0 %v1087
        %1146 = vmatpush.bf16.msra.mxu0 %v1083
        %1147 = vmatpush.bf16.msra.mxu0 %v1079
        %1148 = vmatpush.bf16.msra.mxu0 %v1075
        %1149 = vmatpush.bf16.msra.mxu0 %v1071
        %1150 = vmatpush.bf16.msra.mxu0 %v1067
        %1151 = vmatmul.bf16.gmra.mxu0 %v930
        %v1152 = vpop.f32.mrf.mxu0
        %v1153 = vadd.f32 0.0, %v1152
        %v1154 = vpop.f32.mrf.mxu0
        %1155 = vdwg.mxu0
        %1156 = vmatpush.bf16.msra.mxu0 %v1096
        %1157 = vmatpush.bf16.msra.mxu0 %v1092
        %1158 = vmatpush.bf16.msra.mxu0 %v1088
        %1159 = vmatpush.bf16.msra.mxu0 %v1084
        %1160 = vmatpush.bf16.msra.mxu0 %v1080
        %1161 = vmatpush.bf16.msra.mxu0 %v1076
        %1162 = vmatpush.bf16.msra.mxu0 %v1072
        %1163 = vmatpush.bf16.msra.mxu0 %v1068
        %1164 = vmatmul.bf16.gmra.mxu0 %v930
        %v1165 = vpop.f32.mrf.mxu0
        %v1166 = vadd.f32 0.0, %v1165
        %v1167 = vpop.f32.mrf.mxu0
        %1168 = vdwg.mxu0
        %1169 = vmatpush.bf16.msra.mxu0 %v1097
        %1170 = vmatpush.bf16.msra.mxu0 %v1093
        %1171 = vmatpush.bf16.msra.mxu0 %v1089
        %1172 = vmatpush.bf16.msra.mxu0 %v1085
        %1173 = vmatpush.bf16.msra.mxu0 %v1081
        %1174 = vmatpush.bf16.msra.mxu0 %v1077
        %1175 = vmatpush.bf16.msra.mxu0 %v1073
        %1176 = vmatpush.bf16.msra.mxu0 %v1069
        %1177 = vmatmul.bf16.gmra.mxu0 %v930
        %v1178 = vpop.f32.mrf.mxu0
        %v1179 = vadd.f32 0.0, %v1178
        %v1180 = vpop.f32.mrf.mxu0
        %1181 = vdwg.mxu0
        %v1182 = vadd.f32 %v924, %v1140
        %v1183 = vadd.f32 %v925, %v1153
        %v1184 = vadd.f32 %v926, %v1166
        %v1185 = vadd.f32 %v927, %v1179
        %1186 = vmatpush.bf16.msra.mxu0 %v1094
        %1187 = vmatpush.bf16.msra.mxu0 %v1090
        %1188 = vmatpush.bf16.msra.mxu0 %v1086
        %1189 = vmatpush.bf16.msra.mxu0 %v1082
        %1190 = vmatpush.bf16.msra.mxu0 %v1078
        %1191 = vmatpush.bf16.msra.mxu0 %v1074
        %1192 = vmatpush.bf16.msra.mxu0 %v1070
        %1193 = vmatpush.bf16.msra.mxu0 %v1066
        %1194 = vmatmul.bf16.gmra.mxu0 %v933
        %v1195 = vpop.f32.mrf.mxu0
        %v1196 = vadd.f32 0.0, %v1195
        %v1197 = vpop.f32.mrf.mxu0
        %1198 = vdwg.mxu0
        %1199 = vmatpush.bf16.msra.mxu0 %v1095
        %1200 = vmatpush.bf16.msra.mxu0 %v1091
        %1201 = vmatpush.bf16.msra.mxu0 %v1087
        %1202 = vmatpush.bf16.msra.mxu0 %v1083
        %1203 = vmatpush.bf16.msra.mxu0 %v1079
        %1204 = vmatpush.bf16.msra.mxu0 %v1075
        %1205 = vmatpush.bf16.msra.mxu0 %v1071
        %1206 = vmatpush.bf16.msra.mxu0 %v1067
        %1207 = vmatmul.bf16.gmra.mxu0 %v933
        %v1208 = vpop.f32.mrf.mxu0
        %v1209 = vadd.f32 0.0, %v1208
        %v1210 = vpop.f32.mrf.mxu0
        %1211 = vdwg.mxu0
        %1212 = vmatpush.bf16.msra.mxu0 %v1096
        %1213 = vmatpush.bf16.msra.mxu0 %v1092
        %1214 = vmatpush.bf16.msra.mxu0 %v1088
        %1215 = vmatpush.bf16.msra.mxu0 %v1084
        %1216 = vmatpush.bf16.msra.mxu0 %v1080
        %1217 = vmatpush.bf16.msra.mxu0 %v1076
        %1218 = vmatpush.bf16.msra.mxu0 %v1072
        %1219 = vmatpush.bf16.msra.mxu0 %v1068
        %1220 = vmatmul.bf16.gmra.mxu0 %v933
        %v1221 = vpop.f32.mrf.mxu0
        %v1222 = vadd.f32 0.0, %v1221
        %v1223 = vpop.f32.mrf.mxu0
        %1224 = vdwg.mxu0
        %1225 = vmatpush.bf16.msra.mxu0 %v1097
        %1226 = vmatpush.bf16.msra.mxu0 %v1093
        %1227 = vmatpush.bf16.msra.mxu0 %v1089
        %1228 = vmatpush.bf16.msra.mxu0 %v1085
        %1229 = vmatpush.bf16.msra.mxu0 %v1081
        %1230 = vmatpush.bf16.msra.mxu0 %v1077
        %1231 = vmatpush.bf16.msra.mxu0 %v1073
        %1232 = vmatpush.bf16.msra.mxu0 %v1069
        %1233 = vmatmul.bf16.gmra.mxu0 %v933
        %v1234 = vpop.f32.mrf.mxu0
        %v1235 = vadd.f32 0.0, %v1234
        %v1236 = vpop.f32.mrf.mxu0
        %1237 = vdwg.mxu0
        %v1238 = vadd.f32 %v1182, %v1196
        %v1239 = vadd.f32 %v1183, %v1209
        %v1240 = vadd.f32 %v1184, %v1222
        %v1241 = vadd.f32 %v1185, %v1235
        %1242 = vmatpush.bf16.msra.mxu0 %v1094
        %1243 = vmatpush.bf16.msra.mxu0 %v1090
        %1244 = vmatpush.bf16.msra.mxu0 %v1086
        %1245 = vmatpush.bf16.msra.mxu0 %v1082
        %1246 = vmatpush.bf16.msra.mxu0 %v1078
        %1247 = vmatpush.bf16.msra.mxu0 %v1074
        %1248 = vmatpush.bf16.msra.mxu0 %v1070
        %1249 = vmatpush.bf16.msra.mxu0 %v1066
        %1250 = vmatmul.bf16.gmra.mxu0 %v936
        %v1251 = vpop.f32.mrf.mxu0
        %v1252 = vadd.f32 0.0, %v1251
        %v1253 = vpop.f32.mrf.mxu0
        %1254 = vdwg.mxu0
        %1255 = vmatpush.bf16.msra.mxu0 %v1095
        %1256 = vmatpush.bf16.msra.mxu0 %v1091
        %1257 = vmatpush.bf16.msra.mxu0 %v1087
        %1258 = vmatpush.bf16.msra.mxu0 %v1083
        %1259 = vmatpush.bf16.msra.mxu0 %v1079
        %1260 = vmatpush.bf16.msra.mxu0 %v1075
        %1261 = vmatpush.bf16.msra.mxu0 %v1071
        %1262 = vmatpush.bf16.msra.mxu0 %v1067
        %1263 = vmatmul.bf16.gmra.mxu0 %v936
        %v1264 = vpop.f32.mrf.mxu0
        %v1265 = vadd.f32 0.0, %v1264
        %v1266 = vpop.f32.mrf.mxu0
        %1267 = vdwg.mxu0
        %1268 = vmatpush.bf16.msra.mxu0 %v1096
        %1269 = vmatpush.bf16.msra.mxu0 %v1092
        %1270 = vmatpush.bf16.msra.mxu0 %v1088
        %1271 = vmatpush.bf16.msra.mxu0 %v1084
        %1272 = vmatpush.bf16.msra.mxu0 %v1080
        %1273 = vmatpush.bf16.msra.mxu0 %v1076
        %1274 = vmatpush.bf16.msra.mxu0 %v1072
        %1275 = vmatpush.bf16.msra.mxu0 %v1068
        %1276 = vmatmul.bf16.gmra.mxu0 %v936
        %v1277 = vpop.f32.mrf.mxu0
        %v1278 = vadd.f32 0.0, %v1277
        %v1279 = vpop.f32.mrf.mxu0
        %1280 = vdwg.mxu0
        %1281 = vmatpush.bf16.msra.mxu0 %v1097
        %1282 = vmatpush.bf16.msra.mxu0 %v1093
        %1283 = vmatpush.bf16.msra.mxu0 %v1089
        %1284 = vmatpush.bf16.msra.mxu0 %v1085
        %1285 = vmatpush.bf16.msra.mxu0 %v1081
        %1286 = vmatpush.bf16.msra.mxu0 %v1077
        %1287 = vmatpush.bf16.msra.mxu0 %v1073
        %1288 = vmatpush.bf16.msra.mxu0 %v1069
        %1289 = vmatmul.bf16.gmra.mxu0 %v936
        %v1290 = vpop.f32.mrf.mxu0
        %v1291 = vadd.f32 0.0, %v1290
        %v1292 = vpop.f32.mrf.mxu0
        %1293 = vdwg.mxu0
        %v1294 = vadd.f32 %v1238, %v1252
        %v1295 = vadd.f32 %v1239, %v1265
        %v1296 = vadd.f32 %v1240, %v1278
        %v1297 = vadd.f32 %v1241, %v1291
        %s1298 = scalar_lea.vmem %s171, 6 [#allocation2]
        %v1299 = vld [vmem:[%s1298] sm:$0x3]
        %v1300 = vpack.c.bf16 %v1299, %v1299
        %v1301 = vunpack.c.l.bf16 %v1300
        %v1302 = vsub.f32 %v1299, %v1301
        %v1303 = vpack.c.bf16 %v1302, %v1302
        %v1304 = vunpack.c.l.bf16 %v1303
        %v1305 = vsub.f32 %v1302, %v1304
        %v1306 = vpack.c.bf16 %v1305, %v1305
        %s1307 = scalar_lea.vmem [#allocation5], 768
        %v1308 = vld [vmem:[%s1307] sm:$0xff]
        %v1309 = vld [vmem:[%s1307 + $0x8] sm:$0xff]
        %v1310 = vld [vmem:[%s1307 + $0x10] sm:$0xff]
        %v1311 = vld [vmem:[%s1307 + $0x18] sm:$0xff]
        %v1312 = vld [vmem:[%s1307 + $0x20] sm:$0xff]
        %v1313 = vld [vmem:[%s1307 + $0x28] sm:$0xff]
        %v1314 = vld [vmem:[%s1307 + $0x30] sm:$0xff]
        %v1315 = vld [vmem:[%s1307 + $0x38] sm:$0xff]
        %v1316 = vld [vmem:[%s1307 + $0x40] sm:$0xff]
        %v1317 = vld [vmem:[%s1307 + $0x48] sm:$0xff]
        %v1318 = vld [vmem:[%s1307 + $0x50] sm:$0xff]
        %v1319 = vld [vmem:[%s1307 + $0x58] sm:$0xff]
        %v1320 = vld [vmem:[%s1307 + $0x60] sm:$0xff]
        %v1321 = vld [vmem:[%s1307 + $0x68] sm:$0xff]
        %v1322 = vld [vmem:[%s1307 + $0x70] sm:$0xff]
        %v1323 = vld [vmem:[%s1307 + $0x78] sm:$0xff]
        %v1324 = vld [vmem:[%s1307 + $0x80] sm:$0xff]
        %v1325 = vld [vmem:[%s1307 + $0x88] sm:$0xff]
        %v1326 = vld [vmem:[%s1307 + $0x90] sm:$0xff]
        %v1327 = vld [vmem:[%s1307 + $0x98] sm:$0xff]
        %v1328 = vld [vmem:[%s1307 + $0xa0] sm:$0xff]
        %v1329 = vld [vmem:[%s1307 + $0xa8] sm:$0xff]
        %v1330 = vld [vmem:[%s1307 + $0xb0] sm:$0xff]
        %v1331 = vld [vmem:[%s1307 + $0xb8] sm:$0xff]
        %v1332 = vld [vmem:[%s1307 + $0xc0] sm:$0xff]
        %v1333 = vld [vmem:[%s1307 + $0xc8] sm:$0xff]
        %v1334 = vld [vmem:[%s1307 + $0xd0] sm:$0xff]
        %v1335 = vld [vmem:[%s1307 + $0xd8] sm:$0xff]
        %v1336 = vld [vmem:[%s1307 + $0xe0] sm:$0xff]
        %v1337 = vld [vmem:[%s1307 + $0xe8] sm:$0xff]
        %v1338 = vld [vmem:[%s1307 + $0xf0] sm:$0xff]
        %v1339 = vld [vmem:[%s1307 + $0xf8] sm:$0xff]
        %v1372 = vunpack.c.l.b16 %v1308
        %v1373 = vunpack.c.h.b16 %v1308
        %v1374 = vunpack.c.l.b16 %v1309
        %v1375 = vunpack.c.h.b16 %v1309
        %v1376 = vunpack.c.l.b16 %v1310
        %v1377 = vunpack.c.h.b16 %v1310
        %v1378 = vunpack.c.l.b16 %v1311
        %v1379 = vunpack.c.h.b16 %v1311
        %v1380 = vunpack.c.l.b16 %v1312
        %v1381 = vunpack.c.h.b16 %v1312
        %v1382 = vunpack.c.l.b16 %v1313
        %v1383 = vunpack.c.h.b16 %v1313
        %v1384 = vunpack.c.l.b16 %v1314
        %v1385 = vunpack.c.h.b16 %v1314
        %v1386 = vunpack.c.l.b16 %v1315
        %v1387 = vunpack.c.h.b16 %v1315
        %v1388 = vunpack.c.l.b16 %v1316
        %v1389 = vunpack.c.h.b16 %v1316
        %v1390 = vunpack.c.l.b16 %v1317
        %v1391 = vunpack.c.h.b16 %v1317
        %v1392 = vunpack.c.l.b16 %v1318
        %v1393 = vunpack.c.h.b16 %v1318
        %v1394 = vunpack.c.l.b16 %v1319
        %v1395 = vunpack.c.h.b16 %v1319
        %v1396 = vunpack.c.l.b16 %v1320
        %v1397 = vunpack.c.h.b16 %v1320
        %v1398 = vunpack.c.l.b16 %v1321
        %v1399 = vunpack.c.h.b16 %v1321
        %v1400 = vunpack.c.l.b16 %v1322
        %v1401 = vunpack.c.h.b16 %v1322
        %v1402 = vunpack.c.l.b16 %v1323
        %v1403 = vunpack.c.h.b16 %v1323
        %v1404 = vunpack.c.l.b16 %v1324
        %v1405 = vunpack.c.h.b16 %v1324
        %v1406 = vunpack.c.l.b16 %v1325
        %v1407 = vunpack.c.h.b16 %v1325
        %v1408 = vunpack.c.l.b16 %v1326
        %v1409 = vunpack.c.h.b16 %v1326
        %v1410 = vunpack.c.l.b16 %v1327
        %v1411 = vunpack.c.h.b16 %v1327
        %v1412 = vunpack.c.l.b16 %v1328
        %v1413 = vunpack.c.h.b16 %v1328
        %v1414 = vunpack.c.l.b16 %v1329
        %v1415 = vunpack.c.h.b16 %v1329
        %v1416 = vunpack.c.l.b16 %v1330
        %v1417 = vunpack.c.h.b16 %v1330
        %v1418 = vunpack.c.l.b16 %v1331
        %v1419 = vunpack.c.h.b16 %v1331
        %v1420 = vunpack.c.l.b16 %v1332
        %v1421 = vunpack.c.h.b16 %v1332
        %v1422 = vunpack.c.l.b16 %v1333
        %v1423 = vunpack.c.h.b16 %v1333
        %v1424 = vunpack.c.l.b16 %v1334
        %v1425 = vunpack.c.h.b16 %v1334
        %v1426 = vunpack.c.l.b16 %v1335
        %v1427 = vunpack.c.h.b16 %v1335
        %v1428 = vunpack.c.l.b16 %v1336
        %v1429 = vunpack.c.h.b16 %v1336
        %v1430 = vunpack.c.l.b16 %v1337
        %v1431 = vunpack.c.h.b16 %v1337
        %v1432 = vunpack.c.l.b16 %v1338
        %v1433 = vunpack.c.h.b16 %v1338
        %v1434 = vunpack.c.l.b16 %v1339
        %v1435 = vunpack.c.h.b16 %v1339
        %v1436 = vpack.c.b16 %v1376, %v1372
        %v1437 = vpack.c.b16 %v1377, %v1373
        %v1438 = vpack.c.b16 %v1378, %v1374
        %v1439 = vpack.c.b16 %v1379, %v1375
        %v1440 = vpack.c.b16 %v1384, %v1380
        %v1441 = vpack.c.b16 %v1385, %v1381
        %v1442 = vpack.c.b16 %v1386, %v1382
        %v1443 = vpack.c.b16 %v1387, %v1383
        %v1444 = vpack.c.b16 %v1392, %v1388
        %v1445 = vpack.c.b16 %v1393, %v1389
        %v1446 = vpack.c.b16 %v1394, %v1390
        %v1447 = vpack.c.b16 %v1395, %v1391
        %v1448 = vpack.c.b16 %v1400, %v1396
        %v1449 = vpack.c.b16 %v1401, %v1397
        %v1450 = vpack.c.b16 %v1402, %v1398
        %v1451 = vpack.c.b16 %v1403, %v1399
        %v1452 = vpack.c.b16 %v1408, %v1404
        %v1453 = vpack.c.b16 %v1409, %v1405
        %v1454 = vpack.c.b16 %v1410, %v1406
        %v1455 = vpack.c.b16 %v1411, %v1407
        %v1456 = vpack.c.b16 %v1416, %v1412
        %v1457 = vpack.c.b16 %v1417, %v1413
        %v1458 = vpack.c.b16 %v1418, %v1414
        %v1459 = vpack.c.b16 %v1419, %v1415
        %v1460 = vpack.c.b16 %v1424, %v1420
        %v1461 = vpack.c.b16 %v1425, %v1421
        %v1462 = vpack.c.b16 %v1426, %v1422
        %v1463 = vpack.c.b16 %v1427, %v1423
        %v1464 = vpack.c.b16 %v1432, %v1428
        %v1465 = vpack.c.b16 %v1433, %v1429
        %v1466 = vpack.c.b16 %v1434, %v1430
        %v1467 = vpack.c.b16 %v1435, %v1431
        %1500 = vmatpush.bf16.msra.mxu0 %v1464
        %1501 = vmatpush.bf16.msra.mxu0 %v1460
        %1502 = vmatpush.bf16.msra.mxu0 %v1456
        %1503 = vmatpush.bf16.msra.mxu0 %v1452
        %1504 = vmatpush.bf16.msra.mxu0 %v1448
        %1505 = vmatpush.bf16.msra.mxu0 %v1444
        %1506 = vmatpush.bf16.msra.mxu0 %v1440
        %1507 = vmatpush.bf16.msra.mxu0 %v1436
        %1508 = vmatmul.bf16.gmra.mxu0 %v1300
        %v1509 = vpop.f32.mrf.mxu0
        %v1510 = vadd.f32 0.0, %v1509
        %v1511 = vpop.f32.mrf.mxu0
        %1512 = vdwg.mxu0
        %1513 = vmatpush.bf16.msra.mxu0 %v1465
        %1514 = vmatpush.bf16.msra.mxu0 %v1461
        %1515 = vmatpush.bf16.msra.mxu0 %v1457
        %1516 = vmatpush.bf16.msra.mxu0 %v1453
        %1517 = vmatpush.bf16.msra.mxu0 %v1449
        %1518 = vmatpush.bf16.msra.mxu0 %v1445
        %1519 = vmatpush.bf16.msra.mxu0 %v1441
        %1520 = vmatpush.bf16.msra.mxu0 %v1437
        %1521 = vmatmul.bf16.gmra.mxu0 %v1300
        %v1522 = vpop.f32.mrf.mxu0
        %v1523 = vadd.f32 0.0, %v1522
        %v1524 = vpop.f32.mrf.mxu0
        %1525 = vdwg.mxu0
        %1526 = vmatpush.bf16.msra.mxu0 %v1466
        %1527 = vmatpush.bf16.msra.mxu0 %v1462
        %1528 = vmatpush.bf16.msra.mxu0 %v1458
        %1529 = vmatpush.bf16.msra.mxu0 %v1454
        %1530 = vmatpush.bf16.msra.mxu0 %v1450
        %1531 = vmatpush.bf16.msra.mxu0 %v1446
        %1532 = vmatpush.bf16.msra.mxu0 %v1442
        %1533 = vmatpush.bf16.msra.mxu0 %v1438
        %1534 = vmatmul.bf16.gmra.mxu0 %v1300
        %v1535 = vpop.f32.mrf.mxu0
        %v1536 = vadd.f32 0.0, %v1535
        %v1537 = vpop.f32.mrf.mxu0
        %1538 = vdwg.mxu0
        %1539 = vmatpush.bf16.msra.mxu0 %v1467
        %1540 = vmatpush.bf16.msra.mxu0 %v1463
        %1541 = vmatpush.bf16.msra.mxu0 %v1459
        %1542 = vmatpush.bf16.msra.mxu0 %v1455
        %1543 = vmatpush.bf16.msra.mxu0 %v1451
        %1544 = vmatpush.bf16.msra.mxu0 %v1447
        %1545 = vmatpush.bf16.msra.mxu0 %v1443
        %1546 = vmatpush.bf16.msra.mxu0 %v1439
        %1547 = vmatmul.bf16.gmra.mxu0 %v1300
        %v1548 = vpop.f32.mrf.mxu0
        %v1549 = vadd.f32 0.0, %v1548
        %v1550 = vpop.f32.mrf.mxu0
        %1551 = vdwg.mxu0
        %v1552 = vadd.f32 %v1294, %v1510
        %v1553 = vadd.f32 %v1295, %v1523
        %v1554 = vadd.f32 %v1296, %v1536
        %v1555 = vadd.f32 %v1297, %v1549
        %1556 = vmatpush.bf16.msra.mxu0 %v1464
        %1557 = vmatpush.bf16.msra.mxu0 %v1460
        %1558 = vmatpush.bf16.msra.mxu0 %v1456
        %1559 = vmatpush.bf16.msra.mxu0 %v1452
        %1560 = vmatpush.bf16.msra.mxu0 %v1448
        %1561 = vmatpush.bf16.msra.mxu0 %v1444
        %1562 = vmatpush.bf16.msra.mxu0 %v1440
        %1563 = vmatpush.bf16.msra.mxu0 %v1436
        %1564 = vmatmul.bf16.gmra.mxu0 %v1303
        %v1565 = vpop.f32.mrf.mxu0
        %v1566 = vadd.f32 0.0, %v1565
        %v1567 = vpop.f32.mrf.mxu0
        %1568 = vdwg.mxu0
        %1569 = vmatpush.bf16.msra.mxu0 %v1465
        %1570 = vmatpush.bf16.msra.mxu0 %v1461
        %1571 = vmatpush.bf16.msra.mxu0 %v1457
        %1572 = vmatpush.bf16.msra.mxu0 %v1453
        %1573 = vmatpush.bf16.msra.mxu0 %v1449
        %1574 = vmatpush.bf16.msra.mxu0 %v1445
        %1575 = vmatpush.bf16.msra.mxu0 %v1441
        %1576 = vmatpush.bf16.msra.mxu0 %v1437
        %1577 = vmatmul.bf16.gmra.mxu0 %v1303
        %v1578 = vpop.f32.mrf.mxu0
        %v1579 = vadd.f32 0.0, %v1578
        %v1580 = vpop.f32.mrf.mxu0
        %1581 = vdwg.mxu0
        %1582 = vmatpush.bf16.msra.mxu0 %v1466
        %1583 = vmatpush.bf16.msra.mxu0 %v1462
        %1584 = vmatpush.bf16.msra.mxu0 %v1458
        %1585 = vmatpush.bf16.msra.mxu0 %v1454
        %1586 = vmatpush.bf16.msra.mxu0 %v1450
        %1587 = vmatpush.bf16.msra.mxu0 %v1446
        %1588 = vmatpush.bf16.msra.mxu0 %v1442
        %1589 = vmatpush.bf16.msra.mxu0 %v1438
        %1590 = vmatmul.bf16.gmra.mxu0 %v1303
        %v1591 = vpop.f32.mrf.mxu0
        %v1592 = vadd.f32 0.0, %v1591
        %v1593 = vpop.f32.mrf.mxu0
        %1594 = vdwg.mxu0
        %1595 = vmatpush.bf16.msra.mxu0 %v1467
        %1596 = vmatpush.bf16.msra.mxu0 %v1463
        %1597 = vmatpush.bf16.msra.mxu0 %v1459
        %1598 = vmatpush.bf16.msra.mxu0 %v1455
        %1599 = vmatpush.bf16.msra.mxu0 %v1451
        %1600 = vmatpush.bf16.msra.mxu0 %v1447
        %1601 = vmatpush.bf16.msra.mxu0 %v1443
        %1602 = vmatpush.bf16.msra.mxu0 %v1439
        %1603 = vmatmul.bf16.gmra.mxu0 %v1303
        %v1604 = vpop.f32.mrf.mxu0
        %v1605 = vadd.f32 0.0, %v1604
        %v1606 = vpop.f32.mrf.mxu0
        %1607 = vdwg.mxu0
        %v1608 = vadd.f32 %v1552, %v1566
        %v1609 = vadd.f32 %v1553, %v1579
        %v1610 = vadd.f32 %v1554, %v1592
        %v1611 = vadd.f32 %v1555, %v1605
        %1612 = vmatpush.bf16.msra.mxu0 %v1464
        %1613 = vmatpush.bf16.msra.mxu0 %v1460
        %1614 = vmatpush.bf16.msra.mxu0 %v1456
        %1615 = vmatpush.bf16.msra.mxu0 %v1452
        %1616 = vmatpush.bf16.msra.mxu0 %v1448
        %1617 = vmatpush.bf16.msra.mxu0 %v1444
        %1618 = vmatpush.bf16.msra.mxu0 %v1440
        %1619 = vmatpush.bf16.msra.mxu0 %v1436
        %1620 = vmatmul.bf16.gmra.mxu0 %v1306
        %v1621 = vpop.f32.mrf.mxu0
        %v1622 = vadd.f32 0.0, %v1621
        %v1623 = vpop.f32.mrf.mxu0
        %1624 = vdwg.mxu0
        %1625 = vmatpush.bf16.msra.mxu0 %v1465
        %1626 = vmatpush.bf16.msra.mxu0 %v1461
        %1627 = vmatpush.bf16.msra.mxu0 %v1457
        %1628 = vmatpush.bf16.msra.mxu0 %v1453
        %1629 = vmatpush.bf16.msra.mxu0 %v1449
        %1630 = vmatpush.bf16.msra.mxu0 %v1445
        %1631 = vmatpush.bf16.msra.mxu0 %v1441
        %1632 = vmatpush.bf16.msra.mxu0 %v1437
        %1633 = vmatmul.bf16.gmra.mxu0 %v1306
        %v1634 = vpop.f32.mrf.mxu0
        %v1635 = vadd.f32 0.0, %v1634
        %v1636 = vpop.f32.mrf.mxu0
        %1637 = vdwg.mxu0
        %1638 = vmatpush.bf16.msra.mxu0 %v1466
        %1639 = vmatpush.bf16.msra.mxu0 %v1462
        %1640 = vmatpush.bf16.msra.mxu0 %v1458
        %1641 = vmatpush.bf16.msra.mxu0 %v1454
        %1642 = vmatpush.bf16.msra.mxu0 %v1450
        %1643 = vmatpush.bf16.msra.mxu0 %v1446
        %1644 = vmatpush.bf16.msra.mxu0 %v1442
        %1645 = vmatpush.bf16.msra.mxu0 %v1438
        %1646 = vmatmul.bf16.gmra.mxu0 %v1306
        %v1647 = vpop.f32.mrf.mxu0
        %v1648 = vadd.f32 0.0, %v1647
        %v1649 = vpop.f32.mrf.mxu0
        %1650 = vdwg.mxu0
        %1651 = vmatpush.bf16.msra.mxu0 %v1467
        %1652 = vmatpush.bf16.msra.mxu0 %v1463
        %1653 = vmatpush.bf16.msra.mxu0 %v1459
        %1654 = vmatpush.bf16.msra.mxu0 %v1455
        %1655 = vmatpush.bf16.msra.mxu0 %v1451
        %1656 = vmatpush.bf16.msra.mxu0 %v1447
        %1657 = vmatpush.bf16.msra.mxu0 %v1443
        %1658 = vmatpush.bf16.msra.mxu0 %v1439
        %1659 = vmatmul.bf16.gmra.mxu0 %v1306
        %v1660 = vpop.f32.mrf.mxu0
        %v1661 = vadd.f32 0.0, %v1660
        %v1662 = vpop.f32.mrf.mxu0
        %1663 = vdwg.mxu0
        %v1664 = vadd.f32 %v1608, %v1622
        %v1665 = vadd.f32 %v1609, %v1635
        %v1666 = vadd.f32 %v1610, %v1648
        %v1667 = vadd.f32 %v1611, %v1661
        %v1672 = vrot.slane %v1665, 6
        %v1673 = vrot.slane %v1666, 4
        %v1674 = vrot.slane %v1667, 2
        %vm1675 = vcmask 1041408
        %v1676 = vsel %vm1675, %v1664, %v1672
        %vm1677 = vcmask 1045508
        %v1678 = vsel %vm1677, %v1673, %v1674
        %vm1679 = vcmask 1043456
        %v1680 = vsel %vm1679, %v1676, %v1678
        %1682 = vst [vmem:[%s197] sm:$0xff] %v1680
        %s1683 = sand.u32 %s91, 1
        %s1684 = scalar_lea.sflag [#allocation4], %s1683
        %s1685 = sand.u32 %s91, 1
        %s1686 = smul.addr %s1685, 8
        %s1687 = scalar_lea.vmem [#allocation7], %s1686
        // Predicated region
        $region37: #{tpu_custom_call.1} parent=27 // pred_check
          %p1688 = pneg %p101
        $region38: #{tpu_custom_call.1} parent=27 // pred_check_branch
          %1690 = sbr.rel (%p1688) target = $region40
        $region39: #{tpu_custom_call.1} parent=27 // pred_region
          %1692 = vsyncadd %s1684, 0
          %s1693 = smul.addr %s25, 4
          %s1694 = smul.addr %s24, 4
          %s1695 = sadd.s32 %s1693, %s1694
          %s1696 = smul.addr %s1695, 2
          %s1697 = scalar_lea.hbm %s2, %s1696
          %s1699 = sshll.u32 %s1687, 4
          %s1700 = int_to_ptr.vmem [resolvable:$true] %s1699
          %s1701 = sshll.u32 %s1697, 4
          %s1702 = int_to_ptr.hbm [resolvable:$true] %s1701
          %1704 = dma.vmem_to_hbm [thread:$0]  %s1700, 128, %s1702, %s1684
        $region40: #{tpu_custom_call.1} parent=27 // pred_fallthru
          _
      $region28: #{tpu_custom_call.1} parent=5 // pred_fallthru
        _
      %p1705 = scmp.le.s32.totalorder 2, %s15
      // Predicated region
      $region41: #{tpu_custom_call.1} parent=5 // pred_check
        %p1706 = pneg %p1705
      $region42: #{tpu_custom_call.1} parent=5 // pred_check_branch
        %1708 = sbr.rel (%p1706) target = $region44
      $region43: #{tpu_custom_call.1} parent=5 // pred_region
        %s1709 = ssub.s32 %s15, 2
        // Predicated region
        $region45: #{tpu_custom_call.1} parent=43 // pred_check
          %p1710 = pneg %p107
        $region46: #{tpu_custom_call.1} parent=43 // pred_check_branch
          %1712 = sbr.rel (%p1710) target = $region48
        $region47: #{tpu_custom_call.1} parent=43 // pred_region
          %s1713 = sand.u32 %s92, 1
          %s1714 = scalar_lea.sflag [#allocation4], %s1713
          %s1715 = sand.u32 %s92, 1
          %s1716 = smul.addr %s1715, 8
          %s1717 = scalar_lea.vmem [#allocation7], %s1716
          %1719 = dma.done %s1714, 128
        $region48: #{tpu_custom_call.1} parent=43 // pred_fallthru
          _
      $region44: #{tpu_custom_call.1} parent=5 // pred_fallthru
        _
    $region6: #{tpu_custom_call.1} parent=1 // loop_footer
      %s19 = sadd.s32 1, %s15
    $region7: #{tpu_custom_call.1} parent=1 // loop_footer_branch
      %14 = sbr.rel target = $region3
    $region8: #{tpu_custom_call.1} parent=1 // loop_exit
      _
    %1720 = vsyncpa [#allocation3], 1
    %s1721 = scalar_lea.sflag [#allocation3], 1
    %1722 = vsyncpa %s1721, 1
    %1723 = vsyncpa [#allocation6], 1
    %1724 = vsyncpa [#allocation4], 1
    %s1725 = scalar_lea.sflag [#allocation4], 1
    %1726 = vsyncpa %s1725, 1

</llo_original>
